<compile_context>
chip_gen: v7x
topology: tpu7x:2x2x1
jax: 0.10.0
libtpu: 0.0.40
codegen_flags: <defaults>
</compile_context>

<pallas_src>
import functools
import math

import jax
import jax.numpy as jnp
from jax import lax
from jax.experimental import pallas as pl
from jax.experimental.pallas import tpu as pltpu

# 48 MiB: leaves headroom on v7x (64 MiB physical per TC); far more than these tiles need on
# any generation. (On v5e/v6e with 128 MiB you may raise it if you grow tiles.)
_VMEM_LIMIT = 48 * 1024 * 1024


def _round_up(x: int, m: int) -> int:
    return ((x + m - 1) // m) * m


# ---------------------------------------------------------------------------
# Linear kernel: y = x @ W (+ b), grid = (row_tiles, col_tiles, k_tiles)
# K (contraction) axis last + f32 VMEM accumulator (bounded resident VMEM).
# ---------------------------------------------------------------------------
def _linear_kernel(x_ref, w_ref, *rest, has_bias):
    if has_bias:
        b_ref, o_ref, acc_ref = rest
    else:
        b_ref = None
        o_ref, acc_ref = rest

    k = pl.program_id(2)

    @pl.when(k == 0)
    def _init():
        acc_ref[...] = jnp.zeros_like(acc_ref)

    acc_ref[...] += jnp.dot(x_ref[...], w_ref[...], preferred_element_type=jnp.float32)

    @pl.when(k == pl.num_programs(2) - 1)
    def _finalize():
        out = acc_ref[...]
        if has_bias:
            out = out + b_ref[...].astype(jnp.float32)
        o_ref[...] = out.astype(o_ref.dtype)


def linear_pallas(x2, w, b=None, *, tile_m=512, tile_n=256, tile_k=512):
    """x2: (T, Cin); w: (Cin, Cout); b: (Cout,) or None. Returns (T, Cout)."""
    t, c_in = x2.shape
    c_out = w.shape[1]
    has_bias = b is not None

    tm = min(tile_m, _round_up(t, 8))
    rows = pl.cdiv(t, tm)
    t_pad = rows * tm

    tn = min(tile_n, _round_up(c_out, 128))
    cols = pl.cdiv(c_out, tn)
    c_out_pad = cols * tn

    tk = min(tile_k, _round_up(c_in, 128))
    kts = pl.cdiv(c_in, tk)
    c_in_pad = kts * tk

    xp = x2
    if t_pad != t or c_in_pad != c_in:
        xp = jnp.pad(x2, ((0, t_pad - t), (0, c_in_pad - c_in)))
    wp = w
    if c_in_pad != c_in or c_out_pad != c_out:
        wp = jnp.pad(w, ((0, c_in_pad - c_in), (0, c_out_pad - c_out)))

    in_specs = [
        pl.BlockSpec((tm, tk), lambda i, j, k: (i, k)),
        pl.BlockSpec((tk, tn), lambda i, j, k: (k, j)),
    ]
    args = [xp, wp]
    if has_bias:
        bp = b if c_out_pad == c_out else jnp.pad(b, (0, c_out_pad - c_out))
        args.append(bp.reshape(1, c_out_pad))
        in_specs.append(pl.BlockSpec((1, tn), lambda i, j, k: (0, j)))

    itemsize = jnp.dtype(x2.dtype).itemsize
    cost = pl.CostEstimate(
        flops=2 * t_pad * c_in_pad * c_out_pad,
        transcendentals=0,
        bytes_accessed=itemsize * (t_pad * c_in_pad
                                   + rows * c_in_pad * c_out_pad   # W streamed once per row tile
                                   + t_pad * c_out_pad),
    )

    out = pl.pallas_call(
        functools.partial(_linear_kernel, has_bias=has_bias),
        out_shape=jax.ShapeDtypeStruct((t_pad, c_out_pad), x2.dtype),
        grid_spec=pltpu.PrefetchScalarGridSpec(
            num_scalar_prefetch=0,
            grid=(rows, cols, kts),
            in_specs=in_specs,
            out_specs=pl.BlockSpec((tm, tn), lambda i, j, k: (i, j)),
            scratch_shapes=[pltpu.VMEM((tm, tn), jnp.float32)],
        ),
        compiler_params=pltpu.CompilerParams(
            dimension_semantics=("parallel", "parallel", "arbitrary"),
            vmem_limit_bytes=_VMEM_LIMIT,
        ),
        cost_estimate=cost,
    )(*args)

    if t_pad != t or c_out_pad != c_out:
        out = out[:t, :c_out]
    return out


# ---------------------------------------------------------------------------
# Flash attention with online softmax, head split/merge fused into BlockSpecs.
# qkv: (B, Npad, 3C) view of the qkv-linear output; out: (B, Npad, C) merged heads.
# grid = (B, H, q_tiles, kv_tiles); kv axis last, "arbitrary".
# ---------------------------------------------------------------------------
def _flash_attn_kernel(q_ref, k_ref, v_ref, o_ref, m_sc, l_sc, acc_sc, *,
                       block_k, seq_len, masked, num_full_kv):
    kv = pl.program_id(3)

    @pl.when(kv == 0)
    def _init():
        m_sc[...] = jnp.full(m_sc.shape, -jnp.inf, jnp.float32)
        l_sc[...] = jnp.zeros(l_sc.shape, jnp.float32)
        acc_sc[...] = jnp.zeros(acc_sc.shape, jnp.float32)

    q = q_ref[...]          # (bq, Dh) -- SDPA scale already folded into the qkv weight
    k = k_ref[...]          # (bk, Dh)
    v = v_ref[...]          # (bk, Dh)

    # s = q @ k^T with f32 accumulation on the MXU.
    s = lax.dot_general(q, k, (((1,), (1,)), ((), ())),
                        preferred_element_type=jnp.float32)

    if masked:
        # Only partial kv tiles (padded keys) pay the iota/compare/select cost.
        def _mask(s_):
            key_idx = kv * block_k + lax.broadcasted_iota(jnp.int32, s_.shape, 1)
            return jnp.where(key_idx < seq_len, s_, jnp.float32(-1e30))

        s = lax.cond(kv >= num_full_kv, _mask, lambda s_: s_, s)

    m_prev = m_sc[...]
    m_new = jnp.maximum(m_prev, s.max(axis=-1, keepdims=True))
    alpha = jnp.exp(m_prev - m_new)
    p = jnp.exp(s - m_new)

    l_sc[...] = alpha * l_sc[...] + p.sum(axis=-1, keepdims=True)
    acc_sc[...] = alpha * acc_sc[...] + jnp.dot(
        p.astype(v.dtype), v, preferred_element_type=jnp.float32)
    m_sc[...] = m_new

    @pl.when(kv == pl.num_programs(3) - 1)
    def _finalize():
        inv_l = pl.reciprocal(l_sc[...], approx=True)   # EUP slot: ~free in the epilogue
        o_ref[...] = (acc_sc[...] * inv_l).astype(o_ref.dtype)


def flash_attention_fused(qkv, *, num_heads, head_dim, seq_len, block_q, block_k, out_dtype):
    """qkv: (B, Npad, 3C) with column layout [q | k | v], each head-major within C.
    Returns (B, Npad, C) with heads merged as out[..., h*Dh + d]."""
    b, n_pad, three_c = qkv.shape
    c = three_c // 3
    nh, dh = num_heads, head_dim
    q_tiles = n_pad // block_q
    kv_tiles = n_pad // block_k
    masked = (n_pad != seq_len)
    num_full_kv = seq_len // block_k

    kernel = functools.partial(_flash_attn_kernel, block_k=block_k, seq_len=seq_len,
                               masked=masked, num_full_kv=num_full_kv)

    itemsize = jnp.dtype(qkv.dtype).itemsize
    cost = pl.CostEstimate(
        flops=4 * b * nh * n_pad * n_pad * dh,
        transcendentals=b * nh * n_pad * n_pad,
        bytes_accessed=itemsize * (2 * b * n_pad * c                 # q read + o written
                                   + 2 * b * nh * q_tiles * n_pad * dh),  # k/v re-streamed
    )

    out = pl.pallas_call(
        kernel,
        out_shape=jax.ShapeDtypeStruct((b, n_pad, c), out_dtype),
        grid_spec=pltpu.PrefetchScalarGridSpec(
            num_scalar_prefetch=0,
            grid=(b, nh, q_tiles, kv_tiles),
            in_specs=[
                # q / k / v head tiles picked straight out of the fused (B, Npad, 3C) tensor.
                pl.BlockSpec((None, block_q, dh), lambda bi, hi, qi, ki: (bi, qi, hi)),
                pl.BlockSpec((None, block_k, dh), lambda bi, hi, qi, ki: (bi, ki, nh + hi)),
                pl.BlockSpec((None, block_k, dh), lambda bi, hi, qi, ki: (bi, ki, 2 * nh + hi)),
                # (If profiling shows exposed k/v DMA at large bk on v6e, add
                #  pipeline_mode=pl.Buffered(3) to the k/v specs.)
            ],
            out_specs=pl.BlockSpec((None, block_q, dh), lambda bi, hi, qi, ki: (bi, qi, hi)),
            scratch_shapes=[
                pltpu.VMEM((block_q, 1), jnp.float32),    # running max
                pltpu.VMEM((block_q, 1), jnp.float32),    # running denominator
                pltpu.VMEM((block_q, dh), jnp.float32),   # f32 output accumulator
            ],
        ),
        compiler_params=pltpu.CompilerParams(
            dimension_semantics=("parallel", "parallel", "parallel", "arbitrary"),
            vmem_limit_bytes=_VMEM_LIMIT,
        ),
        cost_estimate=cost,
    )(qkv, qkv, qkv)
    return out


# ---------------------------------------------------------------------------
# Full Attention forward (module default config).
# Weights stored transposed vs torch.nn.Linear: W_qkv (C, 3C), W_proj (C, C).
# ---------------------------------------------------------------------------
def attention_pallas(x, w_qkv, b_qkv, w_proj, b_proj, num_heads, *,
                     block_q=256, block_k=512, tile_m=512, tile_n=256, tile_k=512):
    """x: (B, N, C); returns (B, N, C). b_qkv may be None (qkv_bias=False default)."""
    bsz, n, c = x.shape
    nh = num_heads
    dh = c // nh
    assert c % nh == 0
    # TODO(synk): head_dim that is not a multiple of 128 needs a lane-padding path for the
    # fused head BlockSpecs; the module's typical configs use Dh in {64*k}, here we need 128*k.
    assert dh % 128 == 0, "fused head tiling requires head_dim to be a multiple of 128"
    # TODO(synk): use_rope=True and ln_in_attn=True branches are not implemented
    # (module defaults disable both).

    # Fold the SDPA 1/sqrt(Dh) scale into the q columns of the qkv projection (free, once).
    scale = 1.0 / math.sqrt(dh)
    w_qkv = w_qkv.at[:, :c].multiply(scale)
    if b_qkv is not None:
        b_qkv = b_qkv.at[:c].multiply(scale)

    # Pick blocks and pad the sequence once, up front, so every later reshape is a view.
    bq = min(block_q, _round_up(n, 8))
    bk = min(block_k, _round_up(n, 8))
    n_pad = _round_up(n, math.lcm(bq, bk))
    if n_pad != n:
        x = jnp.pad(x, ((0, 0), (0, n_pad - n), (0, 0)))

    # qkv projection over all B*Npad tokens.
    qkv = linear_pallas(x.reshape(bsz * n_pad, c), w_qkv, b_qkv,
                        tile_m=tile_m, tile_n=tile_n, tile_k=tile_k)
    qkv = qkv.reshape(bsz, n_pad, 3 * c)          # pure view

    # Attention with head split/merge fused into the kernel's BlockSpecs.
    o = flash_attention_fused(qkv, num_heads=nh, head_dim=dh, seq_len=n,
                              block_q=bq, block_k=bk, out_dtype=x.dtype)

    # Output projection (+ bias). proj_drop(p=0) is identity.
    y = linear_pallas(o.reshape(bsz * n_pad, c), w_proj, b_proj,
                      tile_m=tile_m, tile_n=tile_n, tile_k=tile_k)
    y = y.reshape(bsz, n_pad, c)
    if n_pad != n:
        y = y[:, :n, :]
    return y


# ---------------------------------------------------------------------------
# Pure-JAX reference (high-precision matmuls) matching the intended forward.
# ---------------------------------------------------------------------------
def _reference_attention(x, w_qkv, b_qkv, w_proj, b_proj, num_heads):
    hi = lax.Precision.HIGHEST
    bsz, n, c = x.shape
    h = num_heads
    dh = c // h
    qkv = jnp.einsum("bnc,cf->bnf", x, w_qkv, precision=hi)
    if b_qkv is not None:
        qkv = qkv + b_qkv
    qkv = qkv.reshape(bsz, n, 3, h, dh)
    q = jnp.transpose(qkv[:, :, 0], (0, 2, 1, 3))
    k = jnp.transpose(qkv[:, :, 1], (0, 2, 1, 3))
    v = jnp.transpose(qkv[:, :, 2], (0, 2, 1, 3))
    s = jnp.einsum("bhqd,bhkd->bhqk", q, k, precision=hi) / math.sqrt(dh)
    p = jax.nn.softmax(s, axis=-1)
    o = jnp.einsum("bhqk,bhkd->bhqd", p, v, precision=hi)
    o = jnp.transpose(o, (0, 2, 1, 3)).reshape(bsz, n, c)   # torch's reshape(B,N,C) merge order
    return jnp.einsum("bnc,cd->bnd", o, w_proj, precision=hi) + b_proj


if __name__ == "__main__":
    # Small, lane-dense shapes: head_dim = 128, feature dims multiples of 128,
    # N = 1024 exercises multiple q and kv tiles (bq=256, bk=512).
    B, N, C, NUM_HEADS = 2, 1024, 256, 2

    key = jax.random.PRNGKey(0)
    kx, k1, k2, k3 = jax.random.split(key, 4)

    x = jax.random.normal(kx, (B, N, C), dtype=jnp.float32)

    # Deterministic PyTorch-like small-uniform init; weights stored as (in, out).
    lim = 1.0 / math.sqrt(C)
    w_qkv = jax.random.uniform(k1, (C, 3 * C), jnp.float32, -lim, lim)
    w_proj = jax.random.uniform(k2, (C, C), jnp.float32, -lim, lim)
    b_proj = jax.random.uniform(k3, (C,), jnp.float32, -lim, lim)
    b_qkv = None  # qkv_bias=False (module default)

    # f32 correctness run (tile_k=128 forces a multi-step K accumulation in the linear kernel).
    y = attention_pallas(x, w_qkv, b_qkv, w_proj, b_proj, NUM_HEADS, tile_k=128)
    y = jax.block_until_ready(y)
    y_ref = _reference_attention(x, w_qkv, b_qkv, w_proj, b_proj, NUM_HEADS)
    assert y.shape == (B, N, C)
    assert jnp.allclose(y, y_ref, atol=5e-3, rtol=5e-3), "f32 mismatch vs reference"

    # bf16 production path (half HBM/VMEM traffic, bf16 MXU rate, f32 accumulation).
    xb = x.astype(jnp.bfloat16)
    wqb, wpb, bpb = (w_qkv.astype(jnp.bfloat16), w_proj.astype(jnp.bfloat16),
                     b_proj.astype(jnp.bfloat16))
    yb = attention_pallas(xb, wqb, None, wpb, bpb, NUM_HEADS)
    yb = jax.block_until_ready(yb)
    assert yb.dtype == jnp.bfloat16
    yb_ref = _reference_attention(xb.astype(jnp.float32), wqb.astype(jnp.float32), None,
                                  wpb.astype(jnp.float32), bpb.astype(jnp.float32), NUM_HEADS)
    assert jnp.allclose(yb.astype(jnp.float32), yb_ref, atol=3e-2, rtol=3e-2), \
        "bf16 mismatch vs reference"

    print("KERNEL_OK")
</pallas_src>

<mosaic_0001>
module attributes {stable_mosaic.version = 11 : i64} {
  func.func @_linear_kernel(%arg0: i32, %arg1: i32, %arg2: i32, %arg3: memref<512x128xf32, #tpu.memory_space<vmem>>, %arg4: memref<128x256xf32, #tpu.memory_space<vmem>>, %arg5: memref<512x256xf32, #tpu.memory_space<vmem>>, %arg6: memref<512x256xf32, #tpu.memory_space<vmem>>) attributes {dimension_semantics = [#tpu.dimension_semantics<parallel>, #tpu.dimension_semantics<parallel>, #tpu.dimension_semantics<arbitrary>], iteration_bounds = array<i64: 4, 3, 2>, scalar_prefetch = 0 : i64, scratch_operands = 1 : i64, tpu.core_type = #tpu.core_type<tc>, window_params = [{transform_indices = @transform_0, window_bounds = array<i64: 512, 128>}, {transform_indices = @transform_1, window_bounds = array<i64: 128, 256>}, {transform_indices = @transform_2, window_bounds = array<i64: 512, 256>}]} {
    %c0_i32 = arith.constant 0 : i32
    %0 = arith.cmpi eq, %arg2, %c0_i32 : i32
    %1 = arith.extui %0 : i1 to i32
    %c0_i32_0 = arith.constant 0 : i32
    %2 = arith.cmpi ne, %1, %c0_i32_0 : i32
    scf.if %2 {
      %cst_9 = arith.constant 0.000000e+00 : f32
      %12 = vector.broadcast %cst_9 : f32 to vector<512x256xf32>
      %c0_10 = arith.constant 0 : index
      %c0_11 = arith.constant 0 : index
      %13 = vector.load %arg6[%c0_10, %c0_11] : memref<512x256xf32, #tpu.memory_space<vmem>>, vector<512x256xf32>
      tpu.vector_store %arg6[%c0_10, %c0_11], %12 {strides = array<i32>} : memref<512x256xf32, #tpu.memory_space<vmem>>, vector<512x256xf32>,
    } else {
    }
    %c0 = arith.constant 0 : index
    %c0_1 = arith.constant 0 : index
    %3 = vector.load %arg6[%c0, %c0_1] : memref<512x256xf32, #tpu.memory_space<vmem>>, vector<512x256xf32>
    %c0_2 = arith.constant 0 : index
    %c0_3 = arith.constant 0 : index
    %4 = vector.load %arg3[%c0_2, %c0_3] : memref<512x128xf32, #tpu.memory_space<vmem>>, vector<512x128xf32>
    %c0_4 = arith.constant 0 : index
    %c0_5 = arith.constant 0 : index
    %5 = vector.load %arg4[%c0_4, %c0_5] : memref<128x256xf32, #tpu.memory_space<vmem>>, vector<128x256xf32>
    %cst = arith.constant dense<0.000000e+00> : vector<512x256xf32>
    %6 = tpu.matmul %4, %5, %cst {dimension_numbers = #tpu.dot_dimension_numbers<[1], [0], [0], [1], [0, 0, 1, 1], [], []>} : vector<512x128xf32>, vector<128x256xf32>, vector<512x256xf32> -> vector<512x256xf32>
    %7 = arith.addf %3, %6 : vector<512x256xf32>
    %c0_6 = arith.constant 0 : index
    %c0_7 = arith.constant 0 : index
    %8 = vector.load %arg6[%c0_6, %c0_7] : memref<512x256xf32, #tpu.memory_space<vmem>>, vector<512x256xf32>
    tpu.vector_store %arg6[%c0_6, %c0_7], %7 {strides = array<i32>} : memref<512x256xf32, #tpu.memory_space<vmem>>, vector<512x256xf32>,
    %c1_i32 = arith.constant 1 : i32
    %9 = arith.cmpi eq, %arg2, %c1_i32 : i32
    %10 = arith.extui %9 : i1 to i32
    %c0_i32_8 = arith.constant 0 : i32
    %11 = arith.cmpi ne, %10, %c0_i32_8 : i32
    scf.if %11 {
      %c0_9 = arith.constant 0 : index
      %c0_10 = arith.constant 0 : index
      %12 = vector.load %arg6[%c0_9, %c0_10] : memref<512x256xf32, #tpu.memory_space<vmem>>, vector<512x256xf32>
      %c0_11 = arith.constant 0 : index
      %c0_12 = arith.constant 0 : index
      %13 = vector.load %arg5[%c0_11, %c0_12] : memref<512x256xf32, #tpu.memory_space<vmem>>, vector<512x256xf32>
      tpu.vector_store %arg5[%c0_11, %c0_12], %12 {strides = array<i32>} : memref<512x256xf32, #tpu.memory_space<vmem>>, vector<512x256xf32>,
    } else {
    }
    return
  }
  func.func @transform_0(%arg0: i32, %arg1: i32, %arg2: i32) -> (i32, i32) {
    %c0_i32 = arith.constant 0 : i32
    return %arg0, %arg2 : i32, i32
  }
  func.func @transform_1(%arg0: i32, %arg1: i32, %arg2: i32) -> (i32, i32) {
    %c0_i32 = arith.constant 0 : i32
    return %arg2, %arg1 : i32, i32
  }
  func.func @transform_2(%arg0: i32, %arg1: i32, %arg2: i32) -> (i32, i32) {
    %c0_i32 = arith.constant 0 : i32
    return %arg0, %arg1 : i32, i32
  }
}

</mosaic_0001>

<llo_original>
// kernel: tpu_custom_call.1
$region0: #{tpu_custom_call.1}
  #allocation0 [shape = 'u32[]', space=smem, size = 0x4, offset = 0x4, fixed_abs, tag = 'smem constant byte address 0x4 - core index']
  #allocation1 [shape = 'u32[144,128]{1,0:T(1,128)}', space=vmem, size = 0x12000, scoped, tag = 'internal scratch']
  #allocation2 [shape = 'f32[512,256]{1,0:T(8,128)}', space=vmem, size = 0x80000, scoped, tag = 'scratch operand']
  %s0 = inlined_call_operand.hbm [shape: f32[2048,256], index: 0, kind: input, shape index: {}]
  %s1 = inlined_call_operand.hbm [shape: f32[256,768], index: 1, kind: input, shape index: {}]
  %s2 = inlined_call_operand.hbm [shape: f32[2048,768], index: 2, kind: output, shape index: {}]
  %s3 = sld [smem:[#allocation0]]
  $region57: #{tpu_custom_call.1} parent=0
    _
  %s5 = ssub.s32 1, %s3
  %s6 = scalar_select 0, %s5, %s3
  $region1: #{tpu_custom_call.1} parent=0
    #allocation3 [shape = 'u8[524288]{0}', space=vmem, size = 0x80000, scoped, tag = 'input window, operand 0']
    #allocation4 [shape = 's32[2]{0}', space=sflag, size = 0x8, scoped, tag = 'scoped memory for tpu_custom_call.1']
    #allocation5 [shape = 's32[2]{0}', space=sflag, size = 0x8, scoped, tag = 'scoped memory for tpu_custom_call.1']
    #allocation6 [shape = 'u8[262144]{0}', space=vmem, size = 0x40000, scoped, tag = 'input window, operand 1']
    #allocation7 [shape = 's32[2]{0}', space=sflag, size = 0x8, scoped, tag = 'scoped memory for tpu_custom_call.1']
    #allocation8 [shape = 'u8[1048576]{0}', space=vmem, size = 0x100000, scoped, tag = 'output window, operand 0']
    %7 = vsyncpa [#allocation4], 0
    %s8 = scalar_lea.sflag [#allocation4], 1
    %9 = vsyncpa %s8, 0
    %10 = vsyncpa [#allocation7], 0
    %s11 = scalar_lea.sflag [#allocation7], 1
    %12 = vsyncpa %s11, 0
    %13 = vsyncpa [#allocation5], 0
    %s14 = scalar_lea.sflag [#allocation5], 1
    %15 = vsyncpa %s14, 0
    loop: start=0, step=1, limit=26
    $region2: #{tpu_custom_call.1} parent=1 // loop_pre_header
      _
    $region3: #{tpu_custom_call.1} parent=1 // loop_header
      %s17 = sphi 0, %s21
      %p18 = scmp.ge.s32.totalorder %s17, 26
      %s24 = sphi 0, %s43
      %s25 = sphi 0, %s39
      %s26 = sphi 0, %s35
      %s27 = sphi 0, %s24
      %s28 = sphi 0, %s25
      %s29 = sphi 0, %s26
      %s30 = sphi 0, %s27
      %s31 = sphi 0, %s28
      %s32 = sphi 0, %s29
      %s48 = sphi 0, %s50
      %s51 = sphi 0, %s48
      %s52 = sphi 0, %s51
      %s68 = sphi 0, %s52
      %s76 = sphi 0, %s78
      %s79 = sphi 0, %s76
      %s80 = sphi 0, %s79
      %s96 = sphi 0, %s80
      %s104 = sphi 0, %s106
      %s107 = sphi 0, %s104
      %s108 = sphi 0, %s107
      %s124 = sphi 0, %s108
    $region4: #{tpu_custom_call.1} parent=1 // loop_header_branch
      %20 = sbr.rel (%p18) target = $region8
    $region5: #{tpu_custom_call.1} parent=1 // loop_body
      %s22 = ssub.s32 %s17, 1
      %s23 = ssub.s32 %s17, 2
      %s33 = sadd.s32 1, %s26
      %p34 = scmp.ge.s32.totalorder %s33, 2
      %s35 = scalar_select %p34, 0, %s33
      %s36 = sadd.s32 1, %s25
      %s37 = scalar_select %p34, %s36, %s25
      %p38 = scmp.ge.s32.totalorder %s37, 3
      %s39 = scalar_select %p38, 0, %s37
      %s40 = sadd.s32 1, %s24
      %s41 = scalar_select %p38, %s40, %s24
      %p42 = scmp.ge.s32.totalorder %s41, 4
      %s43 = scalar_select %p42, 0, %s41
      %s44 = ssub.s32 %s24, %s43
      %s45 = ssub.s32 %s26, %s35
      %s46 = sor.u32 %s44, %s45
      %p47 = scmp.eq.s32.totalorder %s46, 0
      %s49 = sadd.s32 %s48, 1
      %s50 = scalar_select %p47, %s48, %s49
      %p53 = pneg %p47
      %p54 = scmp.eq.s32.totalorder %s17, 23
      %p55 = por %p53, %p54
      %p56 = scmp.ne.s32.totalorder %s48, %s51
      %p57 = scmp.eq.s32.totalorder %s17, 0
      %p58 = por %p56, %p57
      %p59 = scmp.ne.s32.totalorder %s48, %s51
      %p60 = scmp.eq.s32.totalorder %s22, 23
      %p61 = por %p59, %p60
      %p62 = scmp.ne.s32.totalorder %s51, %s52
      %p63 = scmp.eq.s32.totalorder %s22, 0
      %p64 = por %p62, %p63
      %p65 = scmp.ne.s32.totalorder %s51, %s52
      %p66 = scmp.eq.s32.totalorder %s23, 23
      %p67 = por %p65, %p66
      %p69 = scmp.ne.s32.totalorder %s52, %s68
      %p70 = scmp.eq.s32.totalorder %s23, 0
      %p71 = por %p69, %p70
      %s72 = ssub.s32 %s26, %s35
      %s73 = ssub.s32 %s25, %s39
      %s74 = sor.u32 %s72, %s73
      %p75 = scmp.eq.s32.totalorder %s74, 0
      %s77 = sadd.s32 %s76, 1
      %s78 = scalar_select %p75, %s76, %s77
      %p81 = pneg %p75
      %p82 = scmp.eq.s32.totalorder %s17, 23
      %p83 = por %p81, %p82
      %p84 = scmp.ne.s32.totalorder %s76, %s79
      %p85 = scmp.eq.s32.totalorder %s17, 0
      %p86 = por %p84, %p85
      %p87 = scmp.ne.s32.totalorder %s76, %s79
      %p88 = scmp.eq.s32.totalorder %s22, 23
      %p89 = por %p87, %p88
      %p90 = scmp.ne.s32.totalorder %s79, %s80
      %p91 = scmp.eq.s32.totalorder %s22, 0
      %p92 = por %p90, %p91
      %p93 = scmp.ne.s32.totalorder %s79, %s80
      %p94 = scmp.eq.s32.totalorder %s23, 23
      %p95 = por %p93, %p94
      %p97 = scmp.ne.s32.totalorder %s80, %s96
      %p98 = scmp.eq.s32.totalorder %s23, 0
      %p99 = por %p97, %p98
      %s100 = ssub.s32 %s24, %s43
      %s101 = ssub.s32 %s25, %s39
      %s102 = sor.u32 %s100, %s101
      %p103 = scmp.eq.s32.totalorder %s102, 0
      %s105 = sadd.s32 %s104, 1
      %s106 = scalar_select %p103, %s104, %s105
      %p109 = pneg %p103
      %p110 = scmp.eq.s32.totalorder %s17, 23
      %p111 = por %p109, %p110
      %p112 = scmp.ne.s32.totalorder %s104, %s107
      %p113 = scmp.eq.s32.totalorder %s17, 0
      %p114 = por %p112, %p113
      %p115 = scmp.ne.s32.totalorder %s104, %s107
      %p116 = scmp.eq.s32.totalorder %s22, 23
      %p117 = por %p115, %p116
      %p118 = scmp.ne.s32.totalorder %s107, %s108
      %p119 = scmp.eq.s32.totalorder %s22, 0
      %p120 = por %p118, %p119
      %p121 = scmp.ne.s32.totalorder %s107, %s108
      %p122 = scmp.eq.s32.totalorder %s23, 23
      %p123 = por %p121, %p122
      %p125 = scmp.ne.s32.totalorder %s108, %s124
      %p126 = scmp.eq.s32.totalorder %s23, 0
      %p127 = por %p125, %p126
      %p128 = scmp.le.s32.totalorder 1, %s17
      %p129 = scmp.lt.s32.totalorder %s17, 25
      %p130 = pnand %p128, %p129
      %p131 = pneg %p130
      // Predicated region
      $region9: #{tpu_custom_call.1} parent=5 // pred_check
        _
      $region10: #{tpu_custom_call.1} parent=5 // pred_check_branch
        %133 = sbr.rel (%p130) target = $region12
      $region11: #{tpu_custom_call.1} parent=5 // pred_region
        %s134 = ssub.s32 %s17, 1
      $region12: #{tpu_custom_call.1} parent=5 // pred_fallthru
        _
      %p135 = scmp.lt.s32.totalorder %s17, 24
      // Predicated region
      $region13: #{tpu_custom_call.1} parent=5 // pred_check
        %p136 = pneg %p135
      $region14: #{tpu_custom_call.1} parent=5 // pred_check_branch
        %138 = sbr.rel (%p136) target = $region16
      $region15: #{tpu_custom_call.1} parent=5 // pred_region
        // Predicated region
        $region17: #{tpu_custom_call.1} parent=15 // pred_check
          %p139 = pneg %p58
        $region18: #{tpu_custom_call.1} parent=15 // pred_check_branch
          %141 = sbr.rel (%p139) target = $region20
        $region19: #{tpu_custom_call.1} parent=15 // pred_region
          %s142 = sand.u32 %s48, 1
          %s143 = scalar_lea.sflag [#allocation4], %s142
          %s144 = sand.u32 %s48, 1
          %s145 = smul.addr %s144, 512
          %s146 = scalar_lea.vmem [#allocation3], %s145
          %s147 = smul.u32 64, %s24
          %s149 = ssub.s32 8192, 8192
          %150 = vsyncadd %s143, %s149
          %s151 = smul.addr %s147, 2
          %s152 = sadd.s32 %s26, %s151
          %s153 = smul.addr %s152, 128
          %s154 = scalar_lea.hbm %s0, %s153
          %s155 = sshll.u32 %s146, 4
          %s156 = int_to_ptr.vmem [resolvable:$true] %s155
          %161 = dma.hbm_to_vmem [thread:$0]  %s154, 8192, %s156, %s143, 256, 128, 8
        $region20: #{tpu_custom_call.1} parent=15 // pred_fallthru
          _
        // Predicated region
        $region21: #{tpu_custom_call.1} parent=15 // pred_check
          %p162 = pneg %p86
        $region22: #{tpu_custom_call.1} parent=15 // pred_check_branch
          %164 = sbr.rel (%p162) target = $region24
        $region23: #{tpu_custom_call.1} parent=15 // pred_region
          %s165 = sand.u32 %s76, 1
          %s166 = scalar_lea.sflag [#allocation7], %s165
          %s167 = sand.u32 %s76, 1
          %s168 = smul.addr %s167, 256
          %s169 = scalar_lea.vmem [#allocation6], %s168
          %s170 = smul.u32 16, %s26
          %s171 = smul.u32 2, %s25
          %s173 = ssub.s32 4096, 4096
          %174 = vsyncadd %s166, %s173
          %s175 = smul.addr %s170, 6
          %s176 = sadd.s32 %s171, %s175
          %s177 = smul.addr %s176, 128
          %s178 = scalar_lea.hbm %s1, %s177
          %s179 = sshll.u32 %s169, 4
          %s180 = int_to_ptr.vmem [resolvable:$true] %s179
          %185 = dma.hbm_to_vmem [thread:$0]  %s178, 4096, %s180, %s166, 768, 256, 16
        $region24: #{tpu_custom_call.1} parent=15 // pred_fallthru
          _
      $region16: #{tpu_custom_call.1} parent=5 // pred_fallthru
        _
      %p186 = scmp.le.s32.totalorder 1, %s17
      %p187 = scmp.lt.s32.totalorder %s17, 25
      %p188 = pnand %p186, %p187
      %p189 = pneg %p188
      // Predicated region
      $region25: #{tpu_custom_call.1} parent=5 // pred_check
        _
      $region26: #{tpu_custom_call.1} parent=5 // pred_check_branch
        %191 = sbr.rel (%p188) target = $region28
      $region27: #{tpu_custom_call.1} parent=5 // pred_region
        %s192 = ssub.s32 %s17, 1
        %s193 = sand.u32 %s51, 1
        %s194 = scalar_lea.sflag [#allocation4], %s193
        %s195 = sand.u32 %s51, 1
        %s196 = smul.addr %s195, 512
        %s197 = scalar_lea.vmem [#allocation3], %s196
        // Predicated region
        $region29: #{tpu_custom_call.1} parent=27 // pred_check
          %p198 = pneg %p64
        $region30: #{tpu_custom_call.1} parent=27 // pred_check_branch
          %200 = sbr.rel (%p198) target = $region32
        $region31: #{tpu_custom_call.1} parent=27 // pred_region
          %201 = dma.done %s194, 8192
        $region32: #{tpu_custom_call.1} parent=27 // pred_fallthru
          _
        %s202 = sand.u32 %s79, 1
        %s203 = scalar_lea.sflag [#allocation7], %s202
        %s204 = sand.u32 %s79, 1
        %s205 = smul.addr %s204, 256
        %s206 = scalar_lea.vmem [#allocation6], %s205
        // Predicated region
        $region33: #{tpu_custom_call.1} parent=27 // pred_check
          %p207 = pneg %p92
        $region34: #{tpu_custom_call.1} parent=27 // pred_check_branch
          %209 = sbr.rel (%p207) target = $region36
        $region35: #{tpu_custom_call.1} parent=27 // pred_region
          %210 = dma.done %s203, 4096
        $region36: #{tpu_custom_call.1} parent=27 // pred_fallthru
          _
        %s211 = sand.u32 %s51, 1
        %s212 = scalar_lea.sflag [#allocation4], %s211
        %s213 = sand.u32 %s51, 1
        %s214 = smul.addr %s213, 512
        %s215 = scalar_lea.vmem [#allocation3], %s214
        %p216 = pneg %p64
        %p217 = pneg %p61
        %s218 = sand.u32 %s79, 1
        %s219 = scalar_lea.sflag [#allocation7], %s218
        %s220 = sand.u32 %s79, 1
        %s221 = smul.addr %s220, 256
        %s222 = scalar_lea.vmem [#allocation6], %s221
        %p223 = pneg %p92
        %p224 = pneg %p89
        %p225 = pneg %p120
        %p226 = pneg %p117
        %s227 = sand.u32 %s107, 1
        %s228 = scalar_lea.sflag [#allocation5], %s227
        %s229 = sand.u32 %s107, 1
        %s230 = smul.addr %s229, 1024
        %s231 = scalar_lea.vmem [#allocation8], %s230
        %s232 = smul.u32 64, %s27
        %s233 = smul.u32 16, %s29
        %s234 = smul.u32 2, %s28
        %s235 = smul.u32 64, %s27
        %s236 = smul.u32 2, %s28
        %p237 = scmp.eq.s32.totalorder %s29, 0
        // Predicated region
        $region37: #{tpu_custom_call.1} parent=27 // pred_check
          %p238 = pneg %p237
        $region38: #{tpu_custom_call.1} parent=27 // pred_check_branch
          %240 = sbr.rel (%p238) target = $region40
        $region39: #{tpu_custom_call.1} parent=27 // pred_region
          %241 = vst [vmem:[#allocation2] sm:$0xff] 0.0
          %242 = vst [vmem:[#allocation2 + $0x8] sm:$0xff] 0.0
          %243 = vst [vmem:[#allocation2 + $0x10] sm:$0xff] 0.0
          %244 = vst [vmem:[#allocation2 + $0x18] sm:$0xff] 0.0
          %245 = vst [vmem:[#allocation2 + $0x20] sm:$0xff] 0.0
          %246 = vst [vmem:[#allocation2 + $0x28] sm:$0xff] 0.0
          %247 = vst [vmem:[#allocation2 + $0x30] sm:$0xff] 0.0
          %248 = vst [vmem:[#allocation2 + $0x38] sm:$0xff] 0.0
          %249 = vst [vmem:[#allocation2 + $0x40] sm:$0xff] 0.0
          %250 = vst [vmem:[#allocation2 + $0x48] sm:$0xff] 0.0
          %251 = vst [vmem:[#allocation2 + $0x50] sm:$0xff] 0.0
          %252 = vst [vmem:[#allocation2 + $0x58] sm:$0xff] 0.0
          %253 = vst [vmem:[#allocation2 + $0x60] sm:$0xff] 0.0
          %254 = vst [vmem:[#allocation2 + $0x68] sm:$0xff] 0.0
          %255 = vst [vmem:[#allocation2 + $0x70] sm:$0xff] 0.0
          %256 = vst [vmem:[#allocation2 + $0x78] sm:$0xff] 0.0
          %257 = vst [vmem:[#allocation2 + $0x80] sm:$0xff] 0.0
          %258 = vst [vmem:[#allocation2 + $0x88] sm:$0xff] 0.0
          %259 = vst [vmem:[#allocation2 + $0x90] sm:$0xff] 0.0
          %260 = vst [vmem:[#allocation2 + $0x98] sm:$0xff] 0.0
          %261 = vst [vmem:[#allocation2 + $0xa0] sm:$0xff] 0.0
          %262 = vst [vmem:[#allocation2 + $0xa8] sm:$0xff] 0.0
          %263 = vst [vmem:[#allocation2 + $0xb0] sm:$0xff] 0.0
          %264 = vst [vmem:[#allocation2 + $0xb8] sm:$0xff] 0.0
          %265 = vst [vmem:[#allocation2 + $0xc0] sm:$0xff] 0.0
          %266 = vst [vmem:[#allocation2 + $0xc8] sm:$0xff] 0.0
          %267 = vst [vmem:[#allocation2 + $0xd0] sm:$0xff] 0.0
          %268 = vst [vmem:[#allocation2 + $0xd8] sm:$0xff] 0.0
          %269 = vst [vmem:[#allocation2 + $0xe0] sm:$0xff] 0.0
          %270 = vst [vmem:[#allocation2 + $0xe8] sm:$0xff] 0.0
          %271 = vst [vmem:[#allocation2 + $0xf0] sm:$0xff] 0.0
          %272 = vst [vmem:[#allocation2 + $0xf8] sm:$0xff] 0.0
          %273 = vst [vmem:[#allocation2 + $0x100] sm:$0xff] 0.0
          %274 = vst [vmem:[#allocation2 + $0x108] sm:$0xff] 0.0
          %275 = vst [vmem:[#allocation2 + $0x110] sm:$0xff] 0.0
          %276 = vst [vmem:[#allocation2 + $0x118] sm:$0xff] 0.0
          %277 = vst [vmem:[#allocation2 + $0x120] sm:$0xff] 0.0
          %278 = vst [vmem:[#allocation2 + $0x128] sm:$0xff] 0.0
          %279 = vst [vmem:[#allocation2 + $0x130] sm:$0xff] 0.0
          %280 = vst [vmem:[#allocation2 + $0x138] sm:$0xff] 0.0
          %281 = vst [vmem:[#allocation2 + $0x140] sm:$0xff] 0.0
          %282 = vst [vmem:[#allocation2 + $0x148] sm:$0xff] 0.0
          %283 = vst [vmem:[#allocation2 + $0x150] sm:$0xff] 0.0
          %284 = vst [vmem:[#allocation2 + $0x158] sm:$0xff] 0.0
          %285 = vst [vmem:[#allocation2 + $0x160] sm:$0xff] 0.0
          %286 = vst [vmem:[#allocation2 + $0x168] sm:$0xff] 0.0
          %287 = vst [vmem:[#allocation2 + $0x170] sm:$0xff] 0.0
          %288 = vst [vmem:[#allocation2 + $0x178] sm:$0xff] 0.0
          %289 = vst [vmem:[#allocation2 + $0x180] sm:$0xff] 0.0
          %290 = vst [vmem:[#allocation2 + $0x188] sm:$0xff] 0.0
          %291 = vst [vmem:[#allocation2 + $0x190] sm:$0xff] 0.0
          %292 = vst [vmem:[#allocation2 + $0x198] sm:$0xff] 0.0
          %293 = vst [vmem:[#allocation2 + $0x1a0] sm:$0xff] 0.0
          %294 = vst [vmem:[#allocation2 + $0x1a8] sm:$0xff] 0.0
          %295 = vst [vmem:[#allocation2 + $0x1b0] sm:$0xff] 0.0
          %296 = vst [vmem:[#allocation2 + $0x1b8] sm:$0xff] 0.0
          %297 = vst [vmem:[#allocation2 + $0x1c0] sm:$0xff] 0.0
          %298 = vst [vmem:[#allocation2 + $0x1c8] sm:$0xff] 0.0
          %299 = vst [vmem:[#allocation2 + $0x1d0] sm:$0xff] 0.0
          %300 = vst [vmem:[#allocation2 + $0x1d8] sm:$0xff] 0.0
          %301 = vst [vmem:[#allocation2 + $0x1e0] sm:$0xff] 0.0
          %302 = vst [vmem:[#allocation2 + $0x1e8] sm:$0xff] 0.0
          %303 = vst [vmem:[#allocation2 + $0x1f0] sm:$0xff] 0.0
          %304 = vst [vmem:[#allocation2 + $0x1f8] sm:$0xff] 0.0
          %305 = vst [vmem:[#allocation2 + $0x200] sm:$0xff] 0.0
          %306 = vst [vmem:[#allocation2 + $0x208] sm:$0xff] 0.0
          %307 = vst [vmem:[#allocation2 + $0x210] sm:$0xff] 0.0
          %308 = vst [vmem:[#allocation2 + $0x218] sm:$0xff] 0.0
          %309 = vst [vmem:[#allocation2 + $0x220] sm:$0xff] 0.0
          %310 = vst [vmem:[#allocation2 + $0x228] sm:$0xff] 0.0
          %311 = vst [vmem:[#allocation2 + $0x230] sm:$0xff] 0.0
          %312 = vst [vmem:[#allocation2 + $0x238] sm:$0xff] 0.0
          %313 = vst [vmem:[#allocation2 + $0x240] sm:$0xff] 0.0
          %314 = vst [vmem:[#allocation2 + $0x248] sm:$0xff] 0.0
          %315 = vst [vmem:[#allocation2 + $0x250] sm:$0xff] 0.0
          %316 = vst [vmem:[#allocation2 + $0x258] sm:$0xff] 0.0
          %317 = vst [vmem:[#allocation2 + $0x260] sm:$0xff] 0.0
          %318 = vst [vmem:[#allocation2 + $0x268] sm:$0xff] 0.0
          %319 = vst [vmem:[#allocation2 + $0x270] sm:$0xff] 0.0
          %320 = vst [vmem:[#allocation2 + $0x278] sm:$0xff] 0.0
          %321 = vst [vmem:[#allocation2 + $0x280] sm:$0xff] 0.0
          %322 = vst [vmem:[#allocation2 + $0x288] sm:$0xff] 0.0
          %323 = vst [vmem:[#allocation2 + $0x290] sm:$0xff] 0.0
          %324 = vst [vmem:[#allocation2 + $0x298] sm:$0xff] 0.0
          %325 = vst [vmem:[#allocation2 + $0x2a0] sm:$0xff] 0.0
          %326 = vst [vmem:[#allocation2 + $0x2a8] sm:$0xff] 0.0
          %327 = vst [vmem:[#allocation2 + $0x2b0] sm:$0xff] 0.0
          %328 = vst [vmem:[#allocation2 + $0x2b8] sm:$0xff] 0.0
          %329 = vst [vmem:[#allocation2 + $0x2c0] sm:$0xff] 0.0
          %330 = vst [vmem:[#allocation2 + $0x2c8] sm:$0xff] 0.0
          %331 = vst [vmem:[#allocation2 + $0x2d0] sm:$0xff] 0.0
          %332 = vst [vmem:[#allocation2 + $0x2d8] sm:$0xff] 0.0
          %333 = vst [vmem:[#allocation2 + $0x2e0] sm:$0xff] 0.0
          %334 = vst [vmem:[#allocation2 + $0x2e8] sm:$0xff] 0.0
          %335 = vst [vmem:[#allocation2 + $0x2f0] sm:$0xff] 0.0
          %336 = vst [vmem:[#allocation2 + $0x2f8] sm:$0xff] 0.0
          %337 = vst [vmem:[#allocation2 + $0x300] sm:$0xff] 0.0
          %338 = vst [vmem:[#allocation2 + $0x308] sm:$0xff] 0.0
          %339 = vst [vmem:[#allocation2 + $0x310] sm:$0xff] 0.0
          %340 = vst [vmem:[#allocation2 + $0x318] sm:$0xff] 0.0
          %341 = vst [vmem:[#allocation2 + $0x320] sm:$0xff] 0.0
          %342 = vst [vmem:[#allocation2 + $0x328] sm:$0xff] 0.0
          %343 = vst [vmem:[#allocation2 + $0x330] sm:$0xff] 0.0
          %344 = vst [vmem:[#allocation2 + $0x338] sm:$0xff] 0.0
          %345 = vst [vmem:[#allocation2 + $0x340] sm:$0xff] 0.0
          %346 = vst [vmem:[#allocation2 + $0x348] sm:$0xff] 0.0
          %347 = vst [vmem:[#allocation2 + $0x350] sm:$0xff] 0.0
          %348 = vst [vmem:[#allocation2 + $0x358] sm:$0xff] 0.0
          %349 = vst [vmem:[#allocation2 + $0x360] sm:$0xff] 0.0
          %350 = vst [vmem:[#allocation2 + $0x368] sm:$0xff] 0.0
          %351 = vst [vmem:[#allocation2 + $0x370] sm:$0xff] 0.0
          %352 = vst [vmem:[#allocation2 + $0x378] sm:$0xff] 0.0
          %353 = vst [vmem:[#allocation2 + $0x380] sm:$0xff] 0.0
          %354 = vst [vmem:[#allocation2 + $0x388] sm:$0xff] 0.0
          %355 = vst [vmem:[#allocation2 + $0x390] sm:$0xff] 0.0
          %356 = vst [vmem:[#allocation2 + $0x398] sm:$0xff] 0.0
          %357 = vst [vmem:[#allocation2 + $0x3a0] sm:$0xff] 0.0
          %358 = vst [vmem:[#allocation2 + $0x3a8] sm:$0xff] 0.0
          %359 = vst [vmem:[#allocation2 + $0x3b0] sm:$0xff] 0.0
          %360 = vst [vmem:[#allocation2 + $0x3b8] sm:$0xff] 0.0
          %361 = vst [vmem:[#allocation2 + $0x3c0] sm:$0xff] 0.0
          %362 = vst [vmem:[#allocation2 + $0x3c8] sm:$0xff] 0.0
          %363 = vst [vmem:[#allocation2 + $0x3d0] sm:$0xff] 0.0
          %364 = vst [vmem:[#allocation2 + $0x3d8] sm:$0xff] 0.0
          %365 = vst [vmem:[#allocation2 + $0x3e0] sm:$0xff] 0.0
          %366 = vst [vmem:[#allocation2 + $0x3e8] sm:$0xff] 0.0
          %367 = vst [vmem:[#allocation2 + $0x3f0] sm:$0xff] 0.0
          %368 = vst [vmem:[#allocation2 + $0x3f8] sm:$0xff] 0.0
        $region40: #{tpu_custom_call.1} parent=27 // pred_fallthru
          _
        %v369 = vld [vmem:[#allocation2] sm:$0xff]
        %v370 = vld [vmem:[#allocation2 + $0x8] sm:$0xff]
        %v371 = vld [vmem:[#allocation2 + $0x10] sm:$0xff]
        %v372 = vld [vmem:[#allocation2 + $0x18] sm:$0xff]
        %v373 = vld [vmem:[#allocation2 + $0x20] sm:$0xff]
        %v374 = vld [vmem:[#allocation2 + $0x28] sm:$0xff]
        %v375 = vld [vmem:[#allocation2 + $0x30] sm:$0xff]
        %v376 = vld [vmem:[#allocation2 + $0x38] sm:$0xff]
        %v377 = vld [vmem:[#allocation2 + $0x40] sm:$0xff]
        %v378 = vld [vmem:[#allocation2 + $0x48] sm:$0xff]
        %v379 = vld [vmem:[#allocation2 + $0x50] sm:$0xff]
        %v380 = vld [vmem:[#allocation2 + $0x58] sm:$0xff]
        %v381 = vld [vmem:[#allocation2 + $0x60] sm:$0xff]
        %v382 = vld [vmem:[#allocation2 + $0x68] sm:$0xff]
        %v383 = vld [vmem:[#allocation2 + $0x70] sm:$0xff]
        %v384 = vld [vmem:[#allocation2 + $0x78] sm:$0xff]
        %v385 = vld [vmem:[#allocation2 + $0x80] sm:$0xff]
        %v386 = vld [vmem:[#allocation2 + $0x88] sm:$0xff]
        %v387 = vld [vmem:[#allocation2 + $0x90] sm:$0xff]
        %v388 = vld [vmem:[#allocation2 + $0x98] sm:$0xff]
        %v389 = vld [vmem:[#allocation2 + $0xa0] sm:$0xff]
        %v390 = vld [vmem:[#allocation2 + $0xa8] sm:$0xff]
        %v391 = vld [vmem:[#allocation2 + $0xb0] sm:$0xff]
        %v392 = vld [vmem:[#allocation2 + $0xb8] sm:$0xff]
        %v393 = vld [vmem:[#allocation2 + $0xc0] sm:$0xff]
        %v394 = vld [vmem:[#allocation2 + $0xc8] sm:$0xff]
        %v395 = vld [vmem:[#allocation2 + $0xd0] sm:$0xff]
        %v396 = vld [vmem:[#allocation2 + $0xd8] sm:$0xff]
        %v397 = vld [vmem:[#allocation2 + $0xe0] sm:$0xff]
        %v398 = vld [vmem:[#allocation2 + $0xe8] sm:$0xff]
        %v399 = vld [vmem:[#allocation2 + $0xf0] sm:$0xff]
        %v400 = vld [vmem:[#allocation2 + $0xf8] sm:$0xff]
        %v401 = vld [vmem:[#allocation2 + $0x100] sm:$0xff]
        %v402 = vld [vmem:[#allocation2 + $0x108] sm:$0xff]
        %v403 = vld [vmem:[#allocation2 + $0x110] sm:$0xff]
        %v404 = vld [vmem:[#allocation2 + $0x118] sm:$0xff]
        %v405 = vld [vmem:[#allocation2 + $0x120] sm:$0xff]
        %v406 = vld [vmem:[#allocation2 + $0x128] sm:$0xff]
        %v407 = vld [vmem:[#allocation2 + $0x130] sm:$0xff]
        %v408 = vld [vmem:[#allocation2 + $0x138] sm:$0xff]
        %v409 = vld [vmem:[#allocation2 + $0x140] sm:$0xff]
        %v410 = vld [vmem:[#allocation2 + $0x148] sm:$0xff]
        %v411 = vld [vmem:[#allocation2 + $0x150] sm:$0xff]
        %v412 = vld [vmem:[#allocation2 + $0x158] sm:$0xff]
        %v413 = vld [vmem:[#allocation2 + $0x160] sm:$0xff]
        %v414 = vld [vmem:[#allocation2 + $0x168] sm:$0xff]
        %v415 = vld [vmem:[#allocation2 + $0x170] sm:$0xff]
        %v416 = vld [vmem:[#allocation2 + $0x178] sm:$0xff]
        %v417 = vld [vmem:[#allocation2 + $0x180] sm:$0xff]
        %v418 = vld [vmem:[#allocation2 + $0x188] sm:$0xff]
        %v419 = vld [vmem:[#allocation2 + $0x190] sm:$0xff]
        %v420 = vld [vmem:[#allocation2 + $0x198] sm:$0xff]
        %v421 = vld [vmem:[#allocation2 + $0x1a0] sm:$0xff]
        %v422 = vld [vmem:[#allocation2 + $0x1a8] sm:$0xff]
        %v423 = vld [vmem:[#allocation2 + $0x1b0] sm:$0xff]
        %v424 = vld [vmem:[#allocation2 + $0x1b8] sm:$0xff]
        %v425 = vld [vmem:[#allocation2 + $0x1c0] sm:$0xff]
        %v426 = vld [vmem:[#allocation2 + $0x1c8] sm:$0xff]
        %v427 = vld [vmem:[#allocation2 + $0x1d0] sm:$0xff]
        %v428 = vld [vmem:[#allocation2 + $0x1d8] sm:$0xff]
        %v429 = vld [vmem:[#allocation2 + $0x1e0] sm:$0xff]
        %v430 = vld [vmem:[#allocation2 + $0x1e8] sm:$0xff]
        %v431 = vld [vmem:[#allocation2 + $0x1f0] sm:$0xff]
        %v432 = vld [vmem:[#allocation2 + $0x1f8] sm:$0xff]
        %v433 = vld [vmem:[#allocation2 + $0x200] sm:$0xff]
        %v434 = vld [vmem:[#allocation2 + $0x208] sm:$0xff]
        %v435 = vld [vmem:[#allocation2 + $0x210] sm:$0xff]
        %v436 = vld [vmem:[#allocation2 + $0x218] sm:$0xff]
        %v437 = vld [vmem:[#allocation2 + $0x220] sm:$0xff]
        %v438 = vld [vmem:[#allocation2 + $0x228] sm:$0xff]
        %v439 = vld [vmem:[#allocation2 + $0x230] sm:$0xff]
        %v440 = vld [vmem:[#allocation2 + $0x238] sm:$0xff]
        %v441 = vld [vmem:[#allocation2 + $0x240] sm:$0xff]
        %v442 = vld [vmem:[#allocation2 + $0x248] sm:$0xff]
        %v443 = vld [vmem:[#allocation2 + $0x250] sm:$0xff]
        %v444 = vld [vmem:[#allocation2 + $0x258] sm:$0xff]
        %v445 = vld [vmem:[#allocation2 + $0x260] sm:$0xff]
        %v446 = vld [vmem:[#allocation2 + $0x268] sm:$0xff]
        %v447 = vld [vmem:[#allocation2 + $0x270] sm:$0xff]
        %v448 = vld [vmem:[#allocation2 + $0x278] sm:$0xff]
        %v449 = vld [vmem:[#allocation2 + $0x280] sm:$0xff]
        %v450 = vld [vmem:[#allocation2 + $0x288] sm:$0xff]
        %v451 = vld [vmem:[#allocation2 + $0x290] sm:$0xff]
        %v452 = vld [vmem:[#allocation2 + $0x298] sm:$0xff]
        %v453 = vld [vmem:[#allocation2 + $0x2a0] sm:$0xff]
        %v454 = vld [vmem:[#allocation2 + $0x2a8] sm:$0xff]
        %v455 = vld [vmem:[#allocation2 + $0x2b0] sm:$0xff]
        %v456 = vld [vmem:[#allocation2 + $0x2b8] sm:$0xff]
        %v457 = vld [vmem:[#allocation2 + $0x2c0] sm:$0xff]
        %v458 = vld [vmem:[#allocation2 + $0x2c8] sm:$0xff]
        %v459 = vld [vmem:[#allocation2 + $0x2d0] sm:$0xff]
        %v460 = vld [vmem:[#allocation2 + $0x2d8] sm:$0xff]
        %v461 = vld [vmem:[#allocation2 + $0x2e0] sm:$0xff]
        %v462 = vld [vmem:[#allocation2 + $0x2e8] sm:$0xff]
        %v463 = vld [vmem:[#allocation2 + $0x2f0] sm:$0xff]
        %v464 = vld [vmem:[#allocation2 + $0x2f8] sm:$0xff]
        %v465 = vld [vmem:[#allocation2 + $0x300] sm:$0xff]
        %v466 = vld [vmem:[#allocation2 + $0x308] sm:$0xff]
        %v467 = vld [vmem:[#allocation2 + $0x310] sm:$0xff]
        %v468 = vld [vmem:[#allocation2 + $0x318] sm:$0xff]
        %v469 = vld [vmem:[#allocation2 + $0x320] sm:$0xff]
        %v470 = vld [vmem:[#allocation2 + $0x328] sm:$0xff]
        %v471 = vld [vmem:[#allocation2 + $0x330] sm:$0xff]
        %v472 = vld [vmem:[#allocation2 + $0x338] sm:$0xff]
        %v473 = vld [vmem:[#allocation2 + $0x340] sm:$0xff]
        %v474 = vld [vmem:[#allocation2 + $0x348] sm:$0xff]
        %v475 = vld [vmem:[#allocation2 + $0x350] sm:$0xff]
        %v476 = vld [vmem:[#allocation2 + $0x358] sm:$0xff]
        %v477 = vld [vmem:[#allocation2 + $0x360] sm:$0xff]
        %v478 = vld [vmem:[#allocation2 + $0x368] sm:$0xff]
        %v479 = vld [vmem:[#allocation2 + $0x370] sm:$0xff]
        %v480 = vld [vmem:[#allocation2 + $0x378] sm:$0xff]
        %v481 = vld [vmem:[#allocation2 + $0x380] sm:$0xff]
        %v482 = vld [vmem:[#allocation2 + $0x388] sm:$0xff]
        %v483 = vld [vmem:[#allocation2 + $0x390] sm:$0xff]
        %v484 = vld [vmem:[#allocation2 + $0x398] sm:$0xff]
        %v485 = vld [vmem:[#allocation2 + $0x3a0] sm:$0xff]
        %v486 = vld [vmem:[#allocation2 + $0x3a8] sm:$0xff]
        %v487 = vld [vmem:[#allocation2 + $0x3b0] sm:$0xff]
        %v488 = vld [vmem:[#allocation2 + $0x3b8] sm:$0xff]
        %v489 = vld [vmem:[#allocation2 + $0x3c0] sm:$0xff]
        %v490 = vld [vmem:[#allocation2 + $0x3c8] sm:$0xff]
        %v491 = vld [vmem:[#allocation2 + $0x3d0] sm:$0xff]
        %v492 = vld [vmem:[#allocation2 + $0x3d8] sm:$0xff]
        %v493 = vld [vmem:[#allocation2 + $0x3e0] sm:$0xff]
        %v494 = vld [vmem:[#allocation2 + $0x3e8] sm:$0xff]
        %v495 = vld [vmem:[#allocation2 + $0x3f0] sm:$0xff]
        %v496 = vld [vmem:[#allocation2 + $0x3f8] sm:$0xff]
        %v497 = vld [vmem:[%s197] sm:$0xff]
        %v498 = vld [vmem:[%s197 + $0x8] sm:$0xff]
        %v499 = vld [vmem:[%s197 + $0x10] sm:$0xff]
        %v500 = vld [vmem:[%s197 + $0x18] sm:$0xff]
        %v501 = vld [vmem:[%s197 + $0x20] sm:$0xff]
        %v502 = vld [vmem:[%s197 + $0x28] sm:$0xff]
        %v503 = vld [vmem:[%s197 + $0x30] sm:$0xff]
        %v504 = vld [vmem:[%s197 + $0x38] sm:$0xff]
        %v505 = vld [vmem:[%s197 + $0x40] sm:$0xff]
        %v506 = vld [vmem:[%s197 + $0x48] sm:$0xff]
        %v507 = vld [vmem:[%s197 + $0x50] sm:$0xff]
        %v508 = vld [vmem:[%s197 + $0x58] sm:$0xff]
        %v509 = vld [vmem:[%s197 + $0x60] sm:$0xff]
        %v510 = vld [vmem:[%s197 + $0x68] sm:$0xff]
        %v511 = vld [vmem:[%s197 + $0x70] sm:$0xff]
        %v512 = vld [vmem:[%s197 + $0x78] sm:$0xff]
        %v513 = vld [vmem:[%s197 + $0x80] sm:$0xff]
        %v514 = vld [vmem:[%s197 + $0x88] sm:$0xff]
        %v515 = vld [vmem:[%s197 + $0x90] sm:$0xff]
        %v516 = vld [vmem:[%s197 + $0x98] sm:$0xff]
        %v517 = vld [vmem:[%s197 + $0xa0] sm:$0xff]
        %v518 = vld [vmem:[%s197 + $0xa8] sm:$0xff]
        %v519 = vld [vmem:[%s197 + $0xb0] sm:$0xff]
        %v520 = vld [vmem:[%s197 + $0xb8] sm:$0xff]
        %v521 = vld [vmem:[%s197 + $0xc0] sm:$0xff]
        %v522 = vld [vmem:[%s197 + $0xc8] sm:$0xff]
        %v523 = vld [vmem:[%s197 + $0xd0] sm:$0xff]
        %v524 = vld [vmem:[%s197 + $0xd8] sm:$0xff]
        %v525 = vld [vmem:[%s197 + $0xe0] sm:$0xff]
        %v526 = vld [vmem:[%s197 + $0xe8] sm:$0xff]
        %v527 = vld [vmem:[%s197 + $0xf0] sm:$0xff]
        %v528 = vld [vmem:[%s197 + $0xf8] sm:$0xff]
        %v529 = vld [vmem:[%s197 + $0x100] sm:$0xff]
        %v530 = vld [vmem:[%s197 + $0x108] sm:$0xff]
        %v531 = vld [vmem:[%s197 + $0x110] sm:$0xff]
        %v532 = vld [vmem:[%s197 + $0x118] sm:$0xff]
        %v533 = vld [vmem:[%s197 + $0x120] sm:$0xff]
        %v534 = vld [vmem:[%s197 + $0x128] sm:$0xff]
        %v535 = vld [vmem:[%s197 + $0x130] sm:$0xff]
        %v536 = vld [vmem:[%s197 + $0x138] sm:$0xff]
        %v537 = vld [vmem:[%s197 + $0x140] sm:$0xff]
        %v538 = vld [vmem:[%s197 + $0x148] sm:$0xff]
        %v539 = vld [vmem:[%s197 + $0x150] sm:$0xff]
        %v540 = vld [vmem:[%s197 + $0x158] sm:$0xff]
        %v541 = vld [vmem:[%s197 + $0x160] sm:$0xff]
        %v542 = vld [vmem:[%s197 + $0x168] sm:$0xff]
        %v543 = vld [vmem:[%s197 + $0x170] sm:$0xff]
        %v544 = vld [vmem:[%s197 + $0x178] sm:$0xff]
        %v545 = vld [vmem:[%s197 + $0x180] sm:$0xff]
        %v546 = vld [vmem:[%s197 + $0x188] sm:$0xff]
        %v547 = vld [vmem:[%s197 + $0x190] sm:$0xff]
        %v548 = vld [vmem:[%s197 + $0x198] sm:$0xff]
        %v549 = vld [vmem:[%s197 + $0x1a0] sm:$0xff]
        %v550 = vld [vmem:[%s197 + $0x1a8] sm:$0xff]
        %v551 = vld [vmem:[%s197 + $0x1b0] sm:$0xff]
        %v552 = vld [vmem:[%s197 + $0x1b8] sm:$0xff]
        %v553 = vld [vmem:[%s197 + $0x1c0] sm:$0xff]
        %v554 = vld [vmem:[%s197 + $0x1c8] sm:$0xff]
        %v555 = vld [vmem:[%s197 + $0x1d0] sm:$0xff]
        %v556 = vld [vmem:[%s197 + $0x1d8] sm:$0xff]
        %v557 = vld [vmem:[%s197 + $0x1e0] sm:$0xff]
        %v558 = vld [vmem:[%s197 + $0x1e8] sm:$0xff]
        %v559 = vld [vmem:[%s197 + $0x1f0] sm:$0xff]
        %v560 = vld [vmem:[%s197 + $0x1f8] sm:$0xff]
        %v561 = vld [vmem:[%s206] sm:$0xff]
        %v562 = vld [vmem:[%s206 + $0x8] sm:$0xff]
        %v563 = vld [vmem:[%s206 + $0x10] sm:$0xff]
        %v564 = vld [vmem:[%s206 + $0x18] sm:$0xff]
        %v565 = vld [vmem:[%s206 + $0x20] sm:$0xff]
        %v566 = vld [vmem:[%s206 + $0x28] sm:$0xff]
        %v567 = vld [vmem:[%s206 + $0x30] sm:$0xff]
        %v568 = vld [vmem:[%s206 + $0x38] sm:$0xff]
        %v569 = vld [vmem:[%s206 + $0x40] sm:$0xff]
        %v570 = vld [vmem:[%s206 + $0x48] sm:$0xff]
        %v571 = vld [vmem:[%s206 + $0x50] sm:$0xff]
        %v572 = vld [vmem:[%s206 + $0x58] sm:$0xff]
        %v573 = vld [vmem:[%s206 + $0x60] sm:$0xff]
        %v574 = vld [vmem:[%s206 + $0x68] sm:$0xff]
        %v575 = vld [vmem:[%s206 + $0x70] sm:$0xff]
        %v576 = vld [vmem:[%s206 + $0x78] sm:$0xff]
        %v577 = vld [vmem:[%s206 + $0x80] sm:$0xff]
        %v578 = vld [vmem:[%s206 + $0x88] sm:$0xff]
        %v579 = vld [vmem:[%s206 + $0x90] sm:$0xff]
        %v580 = vld [vmem:[%s206 + $0x98] sm:$0xff]
        %v581 = vld [vmem:[%s206 + $0xa0] sm:$0xff]
        %v582 = vld [vmem:[%s206 + $0xa8] sm:$0xff]
        %v583 = vld [vmem:[%s206 + $0xb0] sm:$0xff]
        %v584 = vld [vmem:[%s206 + $0xb8] sm:$0xff]
        %v585 = vld [vmem:[%s206 + $0xc0] sm:$0xff]
        %v586 = vld [vmem:[%s206 + $0xc8] sm:$0xff]
        %v587 = vld [vmem:[%s206 + $0xd0] sm:$0xff]
        %v588 = vld [vmem:[%s206 + $0xd8] sm:$0xff]
        %v589 = vld [vmem:[%s206 + $0xe0] sm:$0xff]
        %v590 = vld [vmem:[%s206 + $0xe8] sm:$0xff]
        %v591 = vld [vmem:[%s206 + $0xf0] sm:$0xff]
        %v592 = vld [vmem:[%s206 + $0xf8] sm:$0xff]
        %593 = vmatprep.subr.mxu0 %v562
        %594 = vmatpush1.msra.mxu0 %v561
        %595 = vmatprep.subr.mxu0 %v564
        %596 = vmatpush1.msra.mxu0 %v563
        %597 = vmatprep.subr.mxu0 %v566
        %598 = vmatpush1.msra.mxu0 %v565
        %599 = vmatprep.subr.mxu0 %v568
        %600 = vmatpush1.msra.mxu0 %v567
        %601 = vmatprep.subr.mxu0 %v570
        %602 = vmatpush1.msra.mxu0 %v569
        %603 = vmatprep.subr.mxu0 %v572
        %604 = vmatpush1.msra.mxu0 %v571
        %605 = vmatprep.subr.mxu0 %v574
        %606 = vmatpush1.msra.mxu0 %v573
        %607 = vmatprep.subr.mxu0 %v576
        %608 = vmatpush1.msra.mxu0 %v575
        %609 = vmatprep.subr.mxu0 %v578
        %610 = vmatpush1.msra.mxu0 %v577
        %611 = vmatprep.subr.mxu0 %v580
        %612 = vmatpush1.msra.mxu0 %v579
        %613 = vmatprep.subr.mxu0 %v582
        %614 = vmatpush1.msra.mxu0 %v581
        %615 = vmatprep.subr.mxu0 %v584
        %616 = vmatpush1.msra.mxu0 %v583
        %617 = vmatprep.subr.mxu0 %v586
        %618 = vmatpush1.msra.mxu0 %v585
        %619 = vmatprep.subr.mxu0 %v588
        %620 = vmatpush1.msra.mxu0 %v587
        %621 = vmatprep.subr.mxu0 %v590
        %622 = vmatpush1.msra.mxu0 %v589
        %623 = vmatprep.subr.mxu0 %v592
        %624 = vmatpush1.msra.mxu0 %v591
        %625 = vmatprep.subr.mxu0 0.0
        %626 = vmatpush1.msra.mxu0 0.0
        %627 = vmatprep.subr.mxu0 0.0
        %628 = vmatpush1.msra.mxu0 0.0
        %629 = vmatprep.subr.mxu0 0.0
        %630 = vmatpush1.msra.mxu0 0.0
        %631 = vmatprep.subr.mxu0 0.0
        %632 = vmatpush1.msra.mxu0 0.0
        %633 = vmatprep.subr.mxu0 0.0
        %634 = vmatpush1.msra.mxu0 0.0
        %635 = vmatprep.subr.mxu0 0.0
        %636 = vmatpush1.msra.mxu0 0.0
        %637 = vmatprep.subr.mxu0 0.0
        %638 = vmatpush1.msra.mxu0 0.0
        %639 = vmatprep.subr.mxu0 0.0
        %640 = vmatpush1.msra.mxu0 0.0
        %641 = vmatprep.subr.mxu0 0.0
        %642 = vmatpush1.msra.mxu0 0.0
        %643 = vmatprep.subr.mxu0 0.0
        %644 = vmatpush1.msra.mxu0 0.0
        %645 = vmatprep.subr.mxu0 0.0
        %646 = vmatpush1.msra.mxu0 0.0
        %647 = vmatprep.subr.mxu0 0.0
        %648 = vmatpush1.msra.mxu0 0.0
        %649 = vmatprep.subr.mxu0 0.0
        %650 = vmatpush1.msra.mxu0 0.0
        %651 = vmatprep.subr.mxu0 0.0
        %652 = vmatpush1.msra.mxu0 0.0
        %653 = vmatprep.subr.mxu0 0.0
        %654 = vmatpush1.msra.mxu0 0.0
        %655 = vmatprep.subr.mxu0 0.0
        %656 = vmatpush1.msra.mxu0 0.0
        %657 = vmatprep.mubr.f32.mxu0 0.0
        %658 = vmatmul.mubr.f32.gmra.mrb[0].mxu0 %v497
        %v659 = vpop.f32.mrb[0].mxu0
        %v660 = vadd.f32 0.0, %v659
        %v661 = vpop.f32.mrb[0].mxu0
        %v662 = vadd.f32 0.0, %v661
        %663 = vmatprep.mubr.f32.mxu0 0.0
        %664 = vmatmul.mubr.f32.gmra.mrb[0].mxu0 %v498
        %v665 = vpop.f32.mrb[0].mxu0
        %v666 = vadd.f32 0.0, %v665
        %v667 = vpop.f32.mrb[0].mxu0
        %v668 = vadd.f32 0.0, %v667
        %669 = vmatprep.mubr.f32.mxu0 0.0
        %670 = vmatmul.mubr.f32.gmra.mrb[0].mxu0 %v499
        %v671 = vpop.f32.mrb[0].mxu0
        %v672 = vadd.f32 0.0, %v671
        %v673 = vpop.f32.mrb[0].mxu0
        %v674 = vadd.f32 0.0, %v673
        %675 = vmatprep.mubr.f32.mxu0 0.0
        %676 = vmatmul.mubr.f32.gmra.mrb[0].mxu0 %v500
        %v677 = vpop.f32.mrb[0].mxu0
        %v678 = vadd.f32 0.0, %v677
        %v679 = vpop.f32.mrb[0].mxu0
        %v680 = vadd.f32 0.0, %v679
        %681 = vmatprep.mubr.f32.mxu0 0.0
        %682 = vmatmul.mubr.f32.gmra.mrb[0].mxu0 %v501
        %v683 = vpop.f32.mrb[0].mxu0
        %v684 = vadd.f32 0.0, %v683
        %v685 = vpop.f32.mrb[0].mxu0
        %v686 = vadd.f32 0.0, %v685
        %687 = vmatprep.mubr.f32.mxu0 0.0
        %688 = vmatmul.mubr.f32.gmra.mrb[0].mxu0 %v502
        %v689 = vpop.f32.mrb[0].mxu0
        %v690 = vadd.f32 0.0, %v689
        %v691 = vpop.f32.mrb[0].mxu0
        %v692 = vadd.f32 0.0, %v691
        %693 = vmatprep.mubr.f32.mxu0 0.0
        %694 = vmatmul.mubr.f32.gmra.mrb[0].mxu0 %v503
        %v695 = vpop.f32.mrb[0].mxu0
        %v696 = vadd.f32 0.0, %v695
        %v697 = vpop.f32.mrb[0].mxu0
        %v698 = vadd.f32 0.0, %v697
        %699 = vmatprep.mubr.f32.mxu0 0.0
        %700 = vmatmul.mubr.f32.gmra.mrb[0].mxu0 %v504
        %v701 = vpop.f32.mrb[0].mxu0
        %v702 = vadd.f32 0.0, %v701
        %v703 = vpop.f32.mrb[0].mxu0
        %v704 = vadd.f32 0.0, %v703
        %705 = vmatprep.mubr.f32.mxu0 0.0
        %706 = vmatmul.mubr.f32.gmra.mrb[0].mxu0 %v505
        %v707 = vpop.f32.mrb[0].mxu0
        %v708 = vadd.f32 0.0, %v707
        %v709 = vpop.f32.mrb[0].mxu0
        %v710 = vadd.f32 0.0, %v709
        %711 = vmatprep.mubr.f32.mxu0 0.0
        %712 = vmatmul.mubr.f32.gmra.mrb[0].mxu0 %v506
        %v713 = vpop.f32.mrb[0].mxu0
        %v714 = vadd.f32 0.0, %v713
        %v715 = vpop.f32.mrb[0].mxu0
        %v716 = vadd.f32 0.0, %v715
        %717 = vmatprep.mubr.f32.mxu0 0.0
        %718 = vmatmul.mubr.f32.gmra.mrb[0].mxu0 %v507
        %v719 = vpop.f32.mrb[0].mxu0
        %v720 = vadd.f32 0.0, %v719
        %v721 = vpop.f32.mrb[0].mxu0
        %v722 = vadd.f32 0.0, %v721
        %723 = vmatprep.mubr.f32.mxu0 0.0
        %724 = vmatmul.mubr.f32.gmra.mrb[0].mxu0 %v508
        %v725 = vpop.f32.mrb[0].mxu0
        %v726 = vadd.f32 0.0, %v725
        %v727 = vpop.f32.mrb[0].mxu0
        %v728 = vadd.f32 0.0, %v727
        %729 = vmatprep.mubr.f32.mxu0 0.0
        %730 = vmatmul.mubr.f32.gmra.mrb[0].mxu0 %v509
        %v731 = vpop.f32.mrb[0].mxu0
        %v732 = vadd.f32 0.0, %v731
        %v733 = vpop.f32.mrb[0].mxu0
        %v734 = vadd.f32 0.0, %v733
        %735 = vmatprep.mubr.f32.mxu0 0.0
        %736 = vmatmul.mubr.f32.gmra.mrb[0].mxu0 %v510
        %v737 = vpop.f32.mrb[0].mxu0
        %v738 = vadd.f32 0.0, %v737
        %v739 = vpop.f32.mrb[0].mxu0
        %v740 = vadd.f32 0.0, %v739
        %741 = vmatprep.mubr.f32.mxu0 0.0
        %742 = vmatmul.mubr.f32.gmra.mrb[0].mxu0 %v511
        %v743 = vpop.f32.mrb[0].mxu0
        %v744 = vadd.f32 0.0, %v743
        %v745 = vpop.f32.mrb[0].mxu0
        %v746 = vadd.f32 0.0, %v745
        %747 = vmatprep.mubr.f32.mxu0 0.0
        %748 = vmatmul.mubr.f32.gmra.mrb[0].mxu0 %v512
        %v749 = vpop.f32.mrb[0].mxu0
        %v750 = vadd.f32 0.0, %v749
        %v751 = vpop.f32.mrb[0].mxu0
        %v752 = vadd.f32 0.0, %v751
        %753 = vmatprep.mubr.f32.mxu0 0.0
        %754 = vmatmul.mubr.f32.gmra.mrb[0].mxu0 %v513
        %v755 = vpop.f32.mrb[0].mxu0
        %v756 = vadd.f32 0.0, %v755
        %v757 = vpop.f32.mrb[0].mxu0
        %v758 = vadd.f32 0.0, %v757
        %759 = vmatprep.mubr.f32.mxu0 0.0
        %760 = vmatmul.mubr.f32.gmra.mrb[0].mxu0 %v514
        %v761 = vpop.f32.mrb[0].mxu0
        %v762 = vadd.f32 0.0, %v761
        %v763 = vpop.f32.mrb[0].mxu0
        %v764 = vadd.f32 0.0, %v763
        %765 = vmatprep.mubr.f32.mxu0 0.0
        %766 = vmatmul.mubr.f32.gmra.mrb[0].mxu0 %v515
        %v767 = vpop.f32.mrb[0].mxu0
        %v768 = vadd.f32 0.0, %v767
        %v769 = vpop.f32.mrb[0].mxu0
        %v770 = vadd.f32 0.0, %v769
        %771 = vmatprep.mubr.f32.mxu0 0.0
        %772 = vmatmul.mubr.f32.gmra.mrb[0].mxu0 %v516
        %v773 = vpop.f32.mrb[0].mxu0
        %v774 = vadd.f32 0.0, %v773
        %v775 = vpop.f32.mrb[0].mxu0
        %v776 = vadd.f32 0.0, %v775
        %777 = vmatprep.mubr.f32.mxu0 0.0
        %778 = vmatmul.mubr.f32.gmra.mrb[0].mxu0 %v517
        %v779 = vpop.f32.mrb[0].mxu0
        %v780 = vadd.f32 0.0, %v779
        %v781 = vpop.f32.mrb[0].mxu0
        %v782 = vadd.f32 0.0, %v781
        %783 = vmatprep.mubr.f32.mxu0 0.0
        %784 = vmatmul.mubr.f32.gmra.mrb[0].mxu0 %v518
        %v785 = vpop.f32.mrb[0].mxu0
        %v786 = vadd.f32 0.0, %v785
        %v787 = vpop.f32.mrb[0].mxu0
        %v788 = vadd.f32 0.0, %v787
        %789 = vmatprep.mubr.f32.mxu0 0.0
        %790 = vmatmul.mubr.f32.gmra.mrb[0].mxu0 %v519
        %v791 = vpop.f32.mrb[0].mxu0
        %v792 = vadd.f32 0.0, %v791
        %v793 = vpop.f32.mrb[0].mxu0
        %v794 = vadd.f32 0.0, %v793
        %795 = vmatprep.mubr.f32.mxu0 0.0
        %796 = vmatmul.mubr.f32.gmra.mrb[0].mxu0 %v520
        %v797 = vpop.f32.mrb[0].mxu0
        %v798 = vadd.f32 0.0, %v797
        %v799 = vpop.f32.mrb[0].mxu0
        %v800 = vadd.f32 0.0, %v799
        %801 = vmatprep.mubr.f32.mxu0 0.0
        %802 = vmatmul.mubr.f32.gmra.mrb[0].mxu0 %v521
        %v803 = vpop.f32.mrb[0].mxu0
        %v804 = vadd.f32 0.0, %v803
        %v805 = vpop.f32.mrb[0].mxu0
        %v806 = vadd.f32 0.0, %v805
        %807 = vmatprep.mubr.f32.mxu0 0.0
        %808 = vmatmul.mubr.f32.gmra.mrb[0].mxu0 %v522
        %v809 = vpop.f32.mrb[0].mxu0
        %v810 = vadd.f32 0.0, %v809
        %v811 = vpop.f32.mrb[0].mxu0
        %v812 = vadd.f32 0.0, %v811
        %813 = vmatprep.mubr.f32.mxu0 0.0
        %814 = vmatmul.mubr.f32.gmra.mrb[0].mxu0 %v523
        %v815 = vpop.f32.mrb[0].mxu0
        %v816 = vadd.f32 0.0, %v815
        %v817 = vpop.f32.mrb[0].mxu0
        %v818 = vadd.f32 0.0, %v817
        %819 = vmatprep.mubr.f32.mxu0 0.0
        %820 = vmatmul.mubr.f32.gmra.mrb[0].mxu0 %v524
        %v821 = vpop.f32.mrb[0].mxu0
        %v822 = vadd.f32 0.0, %v821
        %v823 = vpop.f32.mrb[0].mxu0
        %v824 = vadd.f32 0.0, %v823
        %825 = vmatprep.mubr.f32.mxu0 0.0
        %826 = vmatmul.mubr.f32.gmra.mrb[0].mxu0 %v525
        %v827 = vpop.f32.mrb[0].mxu0
        %v828 = vadd.f32 0.0, %v827
        %v829 = vpop.f32.mrb[0].mxu0
        %v830 = vadd.f32 0.0, %v829
        %831 = vmatprep.mubr.f32.mxu0 0.0
        %832 = vmatmul.mubr.f32.gmra.mrb[0].mxu0 %v526
        %v833 = vpop.f32.mrb[0].mxu0
        %v834 = vadd.f32 0.0, %v833
        %v835 = vpop.f32.mrb[0].mxu0
        %v836 = vadd.f32 0.0, %v835
        %837 = vmatprep.mubr.f32.mxu0 0.0
        %838 = vmatmul.mubr.f32.gmra.mrb[0].mxu0 %v527
        %v839 = vpop.f32.mrb[0].mxu0
        %v840 = vadd.f32 0.0, %v839
        %v841 = vpop.f32.mrb[0].mxu0
        %v842 = vadd.f32 0.0, %v841
        %843 = vmatprep.mubr.f32.mxu0 0.0
        %844 = vmatmul.mubr.f32.gmra.mrb[0].mxu0 %v528
        %v845 = vpop.f32.mrb[0].mxu0
        %v846 = vadd.f32 0.0, %v845
        %v847 = vpop.f32.mrb[0].mxu0
        %v848 = vadd.f32 0.0, %v847
        %849 = vmatprep.mubr.f32.mxu0 0.0
        %850 = vmatmul.mubr.f32.gmra.mrb[0].mxu0 %v529
        %v851 = vpop.f32.mrb[0].mxu0
        %v852 = vadd.f32 0.0, %v851
        %v853 = vpop.f32.mrb[0].mxu0
        %v854 = vadd.f32 0.0, %v853
        %855 = vmatprep.mubr.f32.mxu0 0.0
        %856 = vmatmul.mubr.f32.gmra.mrb[0].mxu0 %v530
        %v857 = vpop.f32.mrb[0].mxu0
        %v858 = vadd.f32 0.0, %v857
        %v859 = vpop.f32.mrb[0].mxu0
        %v860 = vadd.f32 0.0, %v859
        %861 = vmatprep.mubr.f32.mxu0 0.0
        %862 = vmatmul.mubr.f32.gmra.mrb[0].mxu0 %v531
        %v863 = vpop.f32.mrb[0].mxu0
        %v864 = vadd.f32 0.0, %v863
        %v865 = vpop.f32.mrb[0].mxu0
        %v866 = vadd.f32 0.0, %v865
        %867 = vmatprep.mubr.f32.mxu0 0.0
        %868 = vmatmul.mubr.f32.gmra.mrb[0].mxu0 %v532
        %v869 = vpop.f32.mrb[0].mxu0
        %v870 = vadd.f32 0.0, %v869
        %v871 = vpop.f32.mrb[0].mxu0
        %v872 = vadd.f32 0.0, %v871
        %873 = vmatprep.mubr.f32.mxu0 0.0
        %874 = vmatmul.mubr.f32.gmra.mrb[0].mxu0 %v533
        %v875 = vpop.f32.mrb[0].mxu0
        %v876 = vadd.f32 0.0, %v875
        %v877 = vpop.f32.mrb[0].mxu0
        %v878 = vadd.f32 0.0, %v877
        %879 = vmatprep.mubr.f32.mxu0 0.0
        %880 = vmatmul.mubr.f32.gmra.mrb[0].mxu0 %v534
        %v881 = vpop.f32.mrb[0].mxu0
        %v882 = vadd.f32 0.0, %v881
        %v883 = vpop.f32.mrb[0].mxu0
        %v884 = vadd.f32 0.0, %v883
        %885 = vmatprep.mubr.f32.mxu0 0.0
        %886 = vmatmul.mubr.f32.gmra.mrb[0].mxu0 %v535
        %v887 = vpop.f32.mrb[0].mxu0
        %v888 = vadd.f32 0.0, %v887
        %v889 = vpop.f32.mrb[0].mxu0
        %v890 = vadd.f32 0.0, %v889
        %891 = vmatprep.mubr.f32.mxu0 0.0
        %892 = vmatmul.mubr.f32.gmra.mrb[0].mxu0 %v536
        %v893 = vpop.f32.mrb[0].mxu0
        %v894 = vadd.f32 0.0, %v893
        %v895 = vpop.f32.mrb[0].mxu0
        %v896 = vadd.f32 0.0, %v895
        %897 = vmatprep.mubr.f32.mxu0 0.0
        %898 = vmatmul.mubr.f32.gmra.mrb[0].mxu0 %v537
        %v899 = vpop.f32.mrb[0].mxu0
        %v900 = vadd.f32 0.0, %v899
        %v901 = vpop.f32.mrb[0].mxu0
        %v902 = vadd.f32 0.0, %v901
        %903 = vmatprep.mubr.f32.mxu0 0.0
        %904 = vmatmul.mubr.f32.gmra.mrb[0].mxu0 %v538
        %v905 = vpop.f32.mrb[0].mxu0
        %v906 = vadd.f32 0.0, %v905
        %v907 = vpop.f32.mrb[0].mxu0
        %v908 = vadd.f32 0.0, %v907
        %909 = vmatprep.mubr.f32.mxu0 0.0
        %910 = vmatmul.mubr.f32.gmra.mrb[0].mxu0 %v539
        %v911 = vpop.f32.mrb[0].mxu0
        %v912 = vadd.f32 0.0, %v911
        %v913 = vpop.f32.mrb[0].mxu0
        %v914 = vadd.f32 0.0, %v913
        %915 = vmatprep.mubr.f32.mxu0 0.0
        %916 = vmatmul.mubr.f32.gmra.mrb[0].mxu0 %v540
        %v917 = vpop.f32.mrb[0].mxu0
        %v918 = vadd.f32 0.0, %v917
        %v919 = vpop.f32.mrb[0].mxu0
        %v920 = vadd.f32 0.0, %v919
        %921 = vmatprep.mubr.f32.mxu0 0.0
        %922 = vmatmul.mubr.f32.gmra.mrb[0].mxu0 %v541
        %v923 = vpop.f32.mrb[0].mxu0
        %v924 = vadd.f32 0.0, %v923
        %v925 = vpop.f32.mrb[0].mxu0
        %v926 = vadd.f32 0.0, %v925
        %927 = vmatprep.mubr.f32.mxu0 0.0
        %928 = vmatmul.mubr.f32.gmra.mrb[0].mxu0 %v542
        %v929 = vpop.f32.mrb[0].mxu0
        %v930 = vadd.f32 0.0, %v929
        %v931 = vpop.f32.mrb[0].mxu0
        %v932 = vadd.f32 0.0, %v931
        %933 = vmatprep.mubr.f32.mxu0 0.0
        %934 = vmatmul.mubr.f32.gmra.mrb[0].mxu0 %v543
        %v935 = vpop.f32.mrb[0].mxu0
        %v936 = vadd.f32 0.0, %v935
        %v937 = vpop.f32.mrb[0].mxu0
        %v938 = vadd.f32 0.0, %v937
        %939 = vmatprep.mubr.f32.mxu0 0.0
        %940 = vmatmul.mubr.f32.gmra.mrb[0].mxu0 %v544
        %v941 = vpop.f32.mrb[0].mxu0
        %v942 = vadd.f32 0.0, %v941
        %v943 = vpop.f32.mrb[0].mxu0
        %v944 = vadd.f32 0.0, %v943
        %945 = vmatprep.mubr.f32.mxu0 0.0
        %946 = vmatmul.mubr.f32.gmra.mrb[0].mxu0 %v545
        %v947 = vpop.f32.mrb[0].mxu0
        %v948 = vadd.f32 0.0, %v947
        %v949 = vpop.f32.mrb[0].mxu0
        %v950 = vadd.f32 0.0, %v949
        %951 = vmatprep.mubr.f32.mxu0 0.0
        %952 = vmatmul.mubr.f32.gmra.mrb[0].mxu0 %v546
        %v953 = vpop.f32.mrb[0].mxu0
        %v954 = vadd.f32 0.0, %v953
        %v955 = vpop.f32.mrb[0].mxu0
        %v956 = vadd.f32 0.0, %v955
        %957 = vmatprep.mubr.f32.mxu0 0.0
        %958 = vmatmul.mubr.f32.gmra.mrb[0].mxu0 %v547
        %v959 = vpop.f32.mrb[0].mxu0
        %v960 = vadd.f32 0.0, %v959
        %v961 = vpop.f32.mrb[0].mxu0
        %v962 = vadd.f32 0.0, %v961
        %963 = vmatprep.mubr.f32.mxu0 0.0
        %964 = vmatmul.mubr.f32.gmra.mrb[0].mxu0 %v548
        %v965 = vpop.f32.mrb[0].mxu0
        %v966 = vadd.f32 0.0, %v965
        %v967 = vpop.f32.mrb[0].mxu0
        %v968 = vadd.f32 0.0, %v967
        %969 = vmatprep.mubr.f32.mxu0 0.0
        %970 = vmatmul.mubr.f32.gmra.mrb[0].mxu0 %v549
        %v971 = vpop.f32.mrb[0].mxu0
        %v972 = vadd.f32 0.0, %v971
        %v973 = vpop.f32.mrb[0].mxu0
        %v974 = vadd.f32 0.0, %v973
        %975 = vmatprep.mubr.f32.mxu0 0.0
        %976 = vmatmul.mubr.f32.gmra.mrb[0].mxu0 %v550
        %v977 = vpop.f32.mrb[0].mxu0
        %v978 = vadd.f32 0.0, %v977
        %v979 = vpop.f32.mrb[0].mxu0
        %v980 = vadd.f32 0.0, %v979
        %981 = vmatprep.mubr.f32.mxu0 0.0
        %982 = vmatmul.mubr.f32.gmra.mrb[0].mxu0 %v551
        %v983 = vpop.f32.mrb[0].mxu0
        %v984 = vadd.f32 0.0, %v983
        %v985 = vpop.f32.mrb[0].mxu0
        %v986 = vadd.f32 0.0, %v985
        %987 = vmatprep.mubr.f32.mxu0 0.0
        %988 = vmatmul.mubr.f32.gmra.mrb[0].mxu0 %v552
        %v989 = vpop.f32.mrb[0].mxu0
        %v990 = vadd.f32 0.0, %v989
        %v991 = vpop.f32.mrb[0].mxu0
        %v992 = vadd.f32 0.0, %v991
        %993 = vmatprep.mubr.f32.mxu0 0.0
        %994 = vmatmul.mubr.f32.gmra.mrb[0].mxu0 %v553
        %v995 = vpop.f32.mrb[0].mxu0
        %v996 = vadd.f32 0.0, %v995
        %v997 = vpop.f32.mrb[0].mxu0
        %v998 = vadd.f32 0.0, %v997
        %999 = vmatprep.mubr.f32.mxu0 0.0
        %1000 = vmatmul.mubr.f32.gmra.mrb[0].mxu0 %v554
        %v1001 = vpop.f32.mrb[0].mxu0
        %v1002 = vadd.f32 0.0, %v1001
        %v1003 = vpop.f32.mrb[0].mxu0
        %v1004 = vadd.f32 0.0, %v1003
        %1005 = vmatprep.mubr.f32.mxu0 0.0
        %1006 = vmatmul.mubr.f32.gmra.mrb[0].mxu0 %v555
        %v1007 = vpop.f32.mrb[0].mxu0
        %v1008 = vadd.f32 0.0, %v1007
        %v1009 = vpop.f32.mrb[0].mxu0
        %v1010 = vadd.f32 0.0, %v1009
        %1011 = vmatprep.mubr.f32.mxu0 0.0
        %1012 = vmatmul.mubr.f32.gmra.mrb[0].mxu0 %v556
        %v1013 = vpop.f32.mrb[0].mxu0
        %v1014 = vadd.f32 0.0, %v1013
        %v1015 = vpop.f32.mrb[0].mxu0
        %v1016 = vadd.f32 0.0, %v1015
        %1017 = vmatprep.mubr.f32.mxu0 0.0
        %1018 = vmatmul.mubr.f32.gmra.mrb[0].mxu0 %v557
        %v1019 = vpop.f32.mrb[0].mxu0
        %v1020 = vadd.f32 0.0, %v1019
        %v1021 = vpop.f32.mrb[0].mxu0
        %v1022 = vadd.f32 0.0, %v1021
        %1023 = vmatprep.mubr.f32.mxu0 0.0
        %1024 = vmatmul.mubr.f32.gmra.mrb[0].mxu0 %v558
        %v1025 = vpop.f32.mrb[0].mxu0
        %v1026 = vadd.f32 0.0, %v1025
        %v1027 = vpop.f32.mrb[0].mxu0
        %v1028 = vadd.f32 0.0, %v1027
        %1029 = vmatprep.mubr.f32.mxu0 0.0
        %1030 = vmatmul.mubr.f32.gmra.mrb[0].mxu0 %v559
        %v1031 = vpop.f32.mrb[0].mxu0
        %v1032 = vadd.f32 0.0, %v1031
        %v1033 = vpop.f32.mrb[0].mxu0
        %v1034 = vadd.f32 0.0, %v1033
        %1035 = vmatprep.mubr.f32.mxu0 0.0
        %1036 = vmatmul.mubr.f32.gmra.mrb[0].mxu0 %v560
        %v1037 = vpop.f32.mrb[0].mxu0
        %v1038 = vadd.f32 0.0, %v1037
        %v1039 = vpop.f32.mrb[0].mxu0
        %v1040 = vadd.f32 0.0, %v1039
        %1041 = vdwg.mxu0
        %v1042 = vadd.f32 %v369, %v660
        %v1043 = vadd.f32 %v370, %v662
        %v1044 = vadd.f32 %v371, %v666
        %v1045 = vadd.f32 %v372, %v668
        %v1046 = vadd.f32 %v373, %v672
        %v1047 = vadd.f32 %v374, %v674
        %v1048 = vadd.f32 %v375, %v678
        %v1049 = vadd.f32 %v376, %v680
        %v1050 = vadd.f32 %v377, %v684
        %v1051 = vadd.f32 %v378, %v686
        %v1052 = vadd.f32 %v379, %v690
        %v1053 = vadd.f32 %v380, %v692
        %v1054 = vadd.f32 %v381, %v696
        %v1055 = vadd.f32 %v382, %v698
        %v1056 = vadd.f32 %v383, %v702
        %v1057 = vadd.f32 %v384, %v704
        %v1058 = vadd.f32 %v385, %v708
        %v1059 = vadd.f32 %v386, %v710
        %v1060 = vadd.f32 %v387, %v714
        %v1061 = vadd.f32 %v388, %v716
        %v1062 = vadd.f32 %v389, %v720
        %v1063 = vadd.f32 %v390, %v722
        %v1064 = vadd.f32 %v391, %v726
        %v1065 = vadd.f32 %v392, %v728
        %v1066 = vadd.f32 %v393, %v732
        %v1067 = vadd.f32 %v394, %v734
        %v1068 = vadd.f32 %v395, %v738
        %v1069 = vadd.f32 %v396, %v740
        %v1070 = vadd.f32 %v397, %v744
        %v1071 = vadd.f32 %v398, %v746
        %v1072 = vadd.f32 %v399, %v750
        %v1073 = vadd.f32 %v400, %v752
        %v1074 = vadd.f32 %v401, %v756
        %v1075 = vadd.f32 %v402, %v758
        %v1076 = vadd.f32 %v403, %v762
        %v1077 = vadd.f32 %v404, %v764
        %v1078 = vadd.f32 %v405, %v768
        %v1079 = vadd.f32 %v406, %v770
        %v1080 = vadd.f32 %v407, %v774
        %v1081 = vadd.f32 %v408, %v776
        %v1082 = vadd.f32 %v409, %v780
        %v1083 = vadd.f32 %v410, %v782
        %v1084 = vadd.f32 %v411, %v786
        %v1085 = vadd.f32 %v412, %v788
        %v1086 = vadd.f32 %v413, %v792
        %v1087 = vadd.f32 %v414, %v794
        %v1088 = vadd.f32 %v415, %v798
        %v1089 = vadd.f32 %v416, %v800
        %v1090 = vadd.f32 %v417, %v804
        %v1091 = vadd.f32 %v418, %v806
        %v1092 = vadd.f32 %v419, %v810
        %v1093 = vadd.f32 %v420, %v812
        %v1094 = vadd.f32 %v421, %v816
        %v1095 = vadd.f32 %v422, %v818
        %v1096 = vadd.f32 %v423, %v822
        %v1097 = vadd.f32 %v424, %v824
        %v1098 = vadd.f32 %v425, %v828
        %v1099 = vadd.f32 %v426, %v830
        %v1100 = vadd.f32 %v427, %v834
        %v1101 = vadd.f32 %v428, %v836
        %v1102 = vadd.f32 %v429, %v840
        %v1103 = vadd.f32 %v430, %v842
        %v1104 = vadd.f32 %v431, %v846
        %v1105 = vadd.f32 %v432, %v848
        %v1106 = vadd.f32 %v433, %v852
        %v1107 = vadd.f32 %v434, %v854
        %v1108 = vadd.f32 %v435, %v858
        %v1109 = vadd.f32 %v436, %v860
        %v1110 = vadd.f32 %v437, %v864
        %v1111 = vadd.f32 %v438, %v866
        %v1112 = vadd.f32 %v439, %v870
        %v1113 = vadd.f32 %v440, %v872
        %v1114 = vadd.f32 %v441, %v876
        %v1115 = vadd.f32 %v442, %v878
        %v1116 = vadd.f32 %v443, %v882
        %v1117 = vadd.f32 %v444, %v884
        %v1118 = vadd.f32 %v445, %v888
        %v1119 = vadd.f32 %v446, %v890
        %v1120 = vadd.f32 %v447, %v894
        %v1121 = vadd.f32 %v448, %v896
        %v1122 = vadd.f32 %v449, %v900
        %v1123 = vadd.f32 %v450, %v902
        %v1124 = vadd.f32 %v451, %v906
        %v1125 = vadd.f32 %v452, %v908
        %v1126 = vadd.f32 %v453, %v912
        %v1127 = vadd.f32 %v454, %v914
        %v1128 = vadd.f32 %v455, %v918
        %v1129 = vadd.f32 %v456, %v920
        %v1130 = vadd.f32 %v457, %v924
        %v1131 = vadd.f32 %v458, %v926
        %v1132 = vadd.f32 %v459, %v930
        %v1133 = vadd.f32 %v460, %v932
        %v1134 = vadd.f32 %v461, %v936
        %v1135 = vadd.f32 %v462, %v938
        %v1136 = vadd.f32 %v463, %v942
        %v1137 = vadd.f32 %v464, %v944
        %v1138 = vadd.f32 %v465, %v948
        %v1139 = vadd.f32 %v466, %v950
        %v1140 = vadd.f32 %v467, %v954
        %v1141 = vadd.f32 %v468, %v956
        %v1142 = vadd.f32 %v469, %v960
        %v1143 = vadd.f32 %v470, %v962
        %v1144 = vadd.f32 %v471, %v966
        %v1145 = vadd.f32 %v472, %v968
        %v1146 = vadd.f32 %v473, %v972
        %v1147 = vadd.f32 %v474, %v974
        %v1148 = vadd.f32 %v475, %v978
        %v1149 = vadd.f32 %v476, %v980
        %v1150 = vadd.f32 %v477, %v984
        %v1151 = vadd.f32 %v478, %v986
        %v1152 = vadd.f32 %v479, %v990
        %v1153 = vadd.f32 %v480, %v992
        %v1154 = vadd.f32 %v481, %v996
        %v1155 = vadd.f32 %v482, %v998
        %v1156 = vadd.f32 %v483, %v1002
        %v1157 = vadd.f32 %v484, %v1004
        %v1158 = vadd.f32 %v485, %v1008
        %v1159 = vadd.f32 %v486, %v1010
        %v1160 = vadd.f32 %v487, %v1014
        %v1161 = vadd.f32 %v488, %v1016
        %v1162 = vadd.f32 %v489, %v1020
        %v1163 = vadd.f32 %v490, %v1022
        %v1164 = vadd.f32 %v491, %v1026
        %v1165 = vadd.f32 %v492, %v1028
        %v1166 = vadd.f32 %v493, %v1032
        %v1167 = vadd.f32 %v494, %v1034
        %v1168 = vadd.f32 %v495, %v1038
        %v1169 = vadd.f32 %v496, %v1040
        %1170 = vst [vmem:[#allocation2] sm:$0xff] %v1042
        %1171 = vst [vmem:[#allocation2 + $0x8] sm:$0xff] %v1043
        %1172 = vst [vmem:[#allocation2 + $0x10] sm:$0xff] %v1044
        %1173 = vst [vmem:[#allocation2 + $0x18] sm:$0xff] %v1045
        %1174 = vst [vmem:[#allocation2 + $0x20] sm:$0xff] %v1046
        %1175 = vst [vmem:[#allocation2 + $0x28] sm:$0xff] %v1047
        %1176 = vst [vmem:[#allocation2 + $0x30] sm:$0xff] %v1048
        %1177 = vst [vmem:[#allocation2 + $0x38] sm:$0xff] %v1049
        %1178 = vst [vmem:[#allocation2 + $0x40] sm:$0xff] %v1050
        %1179 = vst [vmem:[#allocation2 + $0x48] sm:$0xff] %v1051
        %1180 = vst [vmem:[#allocation2 + $0x50] sm:$0xff] %v1052
        %1181 = vst [vmem:[#allocation2 + $0x58] sm:$0xff] %v1053
        %1182 = vst [vmem:[#allocation2 + $0x60] sm:$0xff] %v1054
        %1183 = vst [vmem:[#allocation2 + $0x68] sm:$0xff] %v1055
        %1184 = vst [vmem:[#allocation2 + $0x70] sm:$0xff] %v1056
        %1185 = vst [vmem:[#allocation2 + $0x78] sm:$0xff] %v1057
        %1186 = vst [vmem:[#allocation2 + $0x80] sm:$0xff] %v1058
        %1187 = vst [vmem:[#allocation2 + $0x88] sm:$0xff] %v1059
        %1188 = vst [vmem:[#allocation2 + $0x90] sm:$0xff] %v1060
        %1189 = vst [vmem:[#allocation2 + $0x98] sm:$0xff] %v1061
        %1190 = vst [vmem:[#allocation2 + $0xa0] sm:$0xff] %v1062
        %1191 = vst [vmem:[#allocation2 + $0xa8] sm:$0xff] %v1063
        %1192 = vst [vmem:[#allocation2 + $0xb0] sm:$0xff] %v1064
        %1193 = vst [vmem:[#allocation2 + $0xb8] sm:$0xff] %v1065
        %1194 = vst [vmem:[#allocation2 + $0xc0] sm:$0xff] %v1066
        %1195 = vst [vmem:[#allocation2 + $0xc8] sm:$0xff] %v1067
        %1196 = vst [vmem:[#allocation2 + $0xd0] sm:$0xff] %v1068
        %1197 = vst [vmem:[#allocation2 + $0xd8] sm:$0xff] %v1069
        %1198 = vst [vmem:[#allocation2 + $0xe0] sm:$0xff] %v1070
        %1199 = vst [vmem:[#allocation2 + $0xe8] sm:$0xff] %v1071
        %1200 = vst [vmem:[#allocation2 + $0xf0] sm:$0xff] %v1072
        %1201 = vst [vmem:[#allocation2 + $0xf8] sm:$0xff] %v1073
        %1202 = vst [vmem:[#allocation2 + $0x100] sm:$0xff] %v1074
        %1203 = vst [vmem:[#allocation2 + $0x108] sm:$0xff] %v1075
        %1204 = vst [vmem:[#allocation2 + $0x110] sm:$0xff] %v1076
        %1205 = vst [vmem:[#allocation2 + $0x118] sm:$0xff] %v1077
        %1206 = vst [vmem:[#allocation2 + $0x120] sm:$0xff] %v1078
        %1207 = vst [vmem:[#allocation2 + $0x128] sm:$0xff] %v1079
        %1208 = vst [vmem:[#allocation2 + $0x130] sm:$0xff] %v1080
        %1209 = vst [vmem:[#allocation2 + $0x138] sm:$0xff] %v1081
        %1210 = vst [vmem:[#allocation2 + $0x140] sm:$0xff] %v1082
        %1211 = vst [vmem:[#allocation2 + $0x148] sm:$0xff] %v1083
        %1212 = vst [vmem:[#allocation2 + $0x150] sm:$0xff] %v1084
        %1213 = vst [vmem:[#allocation2 + $0x158] sm:$0xff] %v1085
        %1214 = vst [vmem:[#allocation2 + $0x160] sm:$0xff] %v1086
        %1215 = vst [vmem:[#allocation2 + $0x168] sm:$0xff] %v1087
        %1216 = vst [vmem:[#allocation2 + $0x170] sm:$0xff] %v1088
        %1217 = vst [vmem:[#allocation2 + $0x178] sm:$0xff] %v1089
        %1218 = vst [vmem:[#allocation2 + $0x180] sm:$0xff] %v1090
        %1219 = vst [vmem:[#allocation2 + $0x188] sm:$0xff] %v1091
        %1220 = vst [vmem:[#allocation2 + $0x190] sm:$0xff] %v1092
        %1221 = vst [vmem:[#allocation2 + $0x198] sm:$0xff] %v1093
        %1222 = vst [vmem:[#allocation2 + $0x1a0] sm:$0xff] %v1094
        %1223 = vst [vmem:[#allocation2 + $0x1a8] sm:$0xff] %v1095
        %1224 = vst [vmem:[#allocation2 + $0x1b0] sm:$0xff] %v1096
        %1225 = vst [vmem:[#allocation2 + $0x1b8] sm:$0xff] %v1097
        %1226 = vst [vmem:[#allocation2 + $0x1c0] sm:$0xff] %v1098
        %1227 = vst [vmem:[#allocation2 + $0x1c8] sm:$0xff] %v1099
        %1228 = vst [vmem:[#allocation2 + $0x1d0] sm:$0xff] %v1100
        %1229 = vst [vmem:[#allocation2 + $0x1d8] sm:$0xff] %v1101
        %1230 = vst [vmem:[#allocation2 + $0x1e0] sm:$0xff] %v1102
        %1231 = vst [vmem:[#allocation2 + $0x1e8] sm:$0xff] %v1103
        %1232 = vst [vmem:[#allocation2 + $0x1f0] sm:$0xff] %v1104
        %1233 = vst [vmem:[#allocation2 + $0x1f8] sm:$0xff] %v1105
        %1234 = vst [vmem:[#allocation2 + $0x200] sm:$0xff] %v1106
        %1235 = vst [vmem:[#allocation2 + $0x208] sm:$0xff] %v1107
        %1236 = vst [vmem:[#allocation2 + $0x210] sm:$0xff] %v1108
        %1237 = vst [vmem:[#allocation2 + $0x218] sm:$0xff] %v1109
        %1238 = vst [vmem:[#allocation2 + $0x220] sm:$0xff] %v1110
        %1239 = vst [vmem:[#allocation2 + $0x228] sm:$0xff] %v1111
        %1240 = vst [vmem:[#allocation2 + $0x230] sm:$0xff] %v1112
        %1241 = vst [vmem:[#allocation2 + $0x238] sm:$0xff] %v1113
        %1242 = vst [vmem:[#allocation2 + $0x240] sm:$0xff] %v1114
        %1243 = vst [vmem:[#allocation2 + $0x248] sm:$0xff] %v1115
        %1244 = vst [vmem:[#allocation2 + $0x250] sm:$0xff] %v1116
        %1245 = vst [vmem:[#allocation2 + $0x258] sm:$0xff] %v1117
        %1246 = vst [vmem:[#allocation2 + $0x260] sm:$0xff] %v1118
        %1247 = vst [vmem:[#allocation2 + $0x268] sm:$0xff] %v1119
        %1248 = vst [vmem:[#allocation2 + $0x270] sm:$0xff] %v1120
        %1249 = vst [vmem:[#allocation2 + $0x278] sm:$0xff] %v1121
        %1250 = vst [vmem:[#allocation2 + $0x280] sm:$0xff] %v1122
        %1251 = vst [vmem:[#allocation2 + $0x288] sm:$0xff] %v1123
        %1252 = vst [vmem:[#allocation2 + $0x290] sm:$0xff] %v1124
        %1253 = vst [vmem:[#allocation2 + $0x298] sm:$0xff] %v1125
        %1254 = vst [vmem:[#allocation2 + $0x2a0] sm:$0xff] %v1126
        %1255 = vst [vmem:[#allocation2 + $0x2a8] sm:$0xff] %v1127
        %1256 = vst [vmem:[#allocation2 + $0x2b0] sm:$0xff] %v1128
        %1257 = vst [vmem:[#allocation2 + $0x2b8] sm:$0xff] %v1129
        %1258 = vst [vmem:[#allocation2 + $0x2c0] sm:$0xff] %v1130
        %1259 = vst [vmem:[#allocation2 + $0x2c8] sm:$0xff] %v1131
        %1260 = vst [vmem:[#allocation2 + $0x2d0] sm:$0xff] %v1132
        %1261 = vst [vmem:[#allocation2 + $0x2d8] sm:$0xff] %v1133
        %1262 = vst [vmem:[#allocation2 + $0x2e0] sm:$0xff] %v1134
        %1263 = vst [vmem:[#allocation2 + $0x2e8] sm:$0xff] %v1135
        %1264 = vst [vmem:[#allocation2 + $0x2f0] sm:$0xff] %v1136
        %1265 = vst [vmem:[#allocation2 + $0x2f8] sm:$0xff] %v1137
        %1266 = vst [vmem:[#allocation2 + $0x300] sm:$0xff] %v1138
        %1267 = vst [vmem:[#allocation2 + $0x308] sm:$0xff] %v1139
        %1268 = vst [vmem:[#allocation2 + $0x310] sm:$0xff] %v1140
        %1269 = vst [vmem:[#allocation2 + $0x318] sm:$0xff] %v1141
        %1270 = vst [vmem:[#allocation2 + $0x320] sm:$0xff] %v1142
        %1271 = vst [vmem:[#allocation2 + $0x328] sm:$0xff] %v1143
        %1272 = vst [vmem:[#allocation2 + $0x330] sm:$0xff] %v1144
        %1273 = vst [vmem:[#allocation2 + $0x338] sm:$0xff] %v1145
        %1274 = vst [vmem:[#allocation2 + $0x340] sm:$0xff] %v1146
        %1275 = vst [vmem:[#allocation2 + $0x348] sm:$0xff] %v1147
        %1276 = vst [vmem:[#allocation2 + $0x350] sm:$0xff] %v1148
        %1277 = vst [vmem:[#allocation2 + $0x358] sm:$0xff] %v1149
        %1278 = vst [vmem:[#allocation2 + $0x360] sm:$0xff] %v1150
        %1279 = vst [vmem:[#allocation2 + $0x368] sm:$0xff] %v1151
        %1280 = vst [vmem:[#allocation2 + $0x370] sm:$0xff] %v1152
        %1281 = vst [vmem:[#allocation2 + $0x378] sm:$0xff] %v1153
        %1282 = vst [vmem:[#allocation2 + $0x380] sm:$0xff] %v1154
        %1283 = vst [vmem:[#allocation2 + $0x388] sm:$0xff] %v1155
        %1284 = vst [vmem:[#allocation2 + $0x390] sm:$0xff] %v1156
        %1285 = vst [vmem:[#allocation2 + $0x398] sm:$0xff] %v1157
        %1286 = vst [vmem:[#allocation2 + $0x3a0] sm:$0xff] %v1158
        %1287 = vst [vmem:[#allocation2 + $0x3a8] sm:$0xff] %v1159
        %1288 = vst [vmem:[#allocation2 + $0x3b0] sm:$0xff] %v1160
        %1289 = vst [vmem:[#allocation2 + $0x3b8] sm:$0xff] %v1161
        %1290 = vst [vmem:[#allocation2 + $0x3c0] sm:$0xff] %v1162
        %1291 = vst [vmem:[#allocation2 + $0x3c8] sm:$0xff] %v1163
        %1292 = vst [vmem:[#allocation2 + $0x3d0] sm:$0xff] %v1164
        %1293 = vst [vmem:[#allocation2 + $0x3d8] sm:$0xff] %v1165
        %1294 = vst [vmem:[#allocation2 + $0x3e0] sm:$0xff] %v1166
        %1295 = vst [vmem:[#allocation2 + $0x3e8] sm:$0xff] %v1167
        %1296 = vst [vmem:[#allocation2 + $0x3f0] sm:$0xff] %v1168
        %1297 = vst [vmem:[#allocation2 + $0x3f8] sm:$0xff] %v1169
        %p1298 = scmp.eq.s32.totalorder %s29, 1
        // Predicated region
        $region41: #{tpu_custom_call.1} parent=27 // pred_check
          %p1299 = pneg %p1298
        $region42: #{tpu_custom_call.1} parent=27 // pred_check_branch
          %1301 = sbr.rel (%p1299) target = $region44
        $region43: #{tpu_custom_call.1} parent=27 // pred_region
          %v1302 = vld [vmem:[#allocation2] sm:$0xff]
          %v1303 = vld [vmem:[#allocation2 + $0x8] sm:$0xff]
          %v1304 = vld [vmem:[#allocation2 + $0x10] sm:$0xff]
          %v1305 = vld [vmem:[#allocation2 + $0x18] sm:$0xff]
          %v1306 = vld [vmem:[#allocation2 + $0x20] sm:$0xff]
          %v1307 = vld [vmem:[#allocation2 + $0x28] sm:$0xff]
          %v1308 = vld [vmem:[#allocation2 + $0x30] sm:$0xff]
          %v1309 = vld [vmem:[#allocation2 + $0x38] sm:$0xff]
          %v1310 = vld [vmem:[#allocation2 + $0x40] sm:$0xff]
          %v1311 = vld [vmem:[#allocation2 + $0x48] sm:$0xff]
          %v1312 = vld [vmem:[#allocation2 + $0x50] sm:$0xff]
          %v1313 = vld [vmem:[#allocation2 + $0x58] sm:$0xff]
          %v1314 = vld [vmem:[#allocation2 + $0x60] sm:$0xff]
          %v1315 = vld [vmem:[#allocation2 + $0x68] sm:$0xff]
          %v1316 = vld [vmem:[#allocation2 + $0x70] sm:$0xff]
          %v1317 = vld [vmem:[#allocation2 + $0x78] sm:$0xff]
          %v1318 = vld [vmem:[#allocation2 + $0x80] sm:$0xff]
          %v1319 = vld [vmem:[#allocation2 + $0x88] sm:$0xff]
          %v1320 = vld [vmem:[#allocation2 + $0x90] sm:$0xff]
          %v1321 = vld [vmem:[#allocation2 + $0x98] sm:$0xff]
          %v1322 = vld [vmem:[#allocation2 + $0xa0] sm:$0xff]
          %v1323 = vld [vmem:[#allocation2 + $0xa8] sm:$0xff]
          %v1324 = vld [vmem:[#allocation2 + $0xb0] sm:$0xff]
          %v1325 = vld [vmem:[#allocation2 + $0xb8] sm:$0xff]
          %v1326 = vld [vmem:[#allocation2 + $0xc0] sm:$0xff]
          %v1327 = vld [vmem:[#allocation2 + $0xc8] sm:$0xff]
          %v1328 = vld [vmem:[#allocation2 + $0xd0] sm:$0xff]
          %v1329 = vld [vmem:[#allocation2 + $0xd8] sm:$0xff]
          %v1330 = vld [vmem:[#allocation2 + $0xe0] sm:$0xff]
          %v1331 = vld [vmem:[#allocation2 + $0xe8] sm:$0xff]
          %v1332 = vld [vmem:[#allocation2 + $0xf0] sm:$0xff]
          %v1333 = vld [vmem:[#allocation2 + $0xf8] sm:$0xff]
          %v1334 = vld [vmem:[#allocation2 + $0x100] sm:$0xff]
          %v1335 = vld [vmem:[#allocation2 + $0x108] sm:$0xff]
          %v1336 = vld [vmem:[#allocation2 + $0x110] sm:$0xff]
          %v1337 = vld [vmem:[#allocation2 + $0x118] sm:$0xff]
          %v1338 = vld [vmem:[#allocation2 + $0x120] sm:$0xff]
          %v1339 = vld [vmem:[#allocation2 + $0x128] sm:$0xff]
          %v1340 = vld [vmem:[#allocation2 + $0x130] sm:$0xff]
          %v1341 = vld [vmem:[#allocation2 + $0x138] sm:$0xff]
          %v1342 = vld [vmem:[#allocation2 + $0x140] sm:$0xff]
          %v1343 = vld [vmem:[#allocation2 + $0x148] sm:$0xff]
          %v1344 = vld [vmem:[#allocation2 + $0x150] sm:$0xff]
          %v1345 = vld [vmem:[#allocation2 + $0x158] sm:$0xff]
          %v1346 = vld [vmem:[#allocation2 + $0x160] sm:$0xff]
          %v1347 = vld [vmem:[#allocation2 + $0x168] sm:$0xff]
          %v1348 = vld [vmem:[#allocation2 + $0x170] sm:$0xff]
          %v1349 = vld [vmem:[#allocation2 + $0x178] sm:$0xff]
          %v1350 = vld [vmem:[#allocation2 + $0x180] sm:$0xff]
          %v1351 = vld [vmem:[#allocation2 + $0x188] sm:$0xff]
          %v1352 = vld [vmem:[#allocation2 + $0x190] sm:$0xff]
          %v1353 = vld [vmem:[#allocation2 + $0x198] sm:$0xff]
          %v1354 = vld [vmem:[#allocation2 + $0x1a0] sm:$0xff]
          %v1355 = vld [vmem:[#allocation2 + $0x1a8] sm:$0xff]
          %v1356 = vld [vmem:[#allocation2 + $0x1b0] sm:$0xff]
          %v1357 = vld [vmem:[#allocation2 + $0x1b8] sm:$0xff]
          %v1358 = vld [vmem:[#allocation2 + $0x1c0] sm:$0xff]
          %v1359 = vld [vmem:[#allocation2 + $0x1c8] sm:$0xff]
          %v1360 = vld [vmem:[#allocation2 + $0x1d0] sm:$0xff]
          %v1361 = vld [vmem:[#allocation2 + $0x1d8] sm:$0xff]
          %v1362 = vld [vmem:[#allocation2 + $0x1e0] sm:$0xff]
          %v1363 = vld [vmem:[#allocation2 + $0x1e8] sm:$0xff]
          %v1364 = vld [vmem:[#allocation2 + $0x1f0] sm:$0xff]
          %v1365 = vld [vmem:[#allocation2 + $0x1f8] sm:$0xff]
          %v1366 = vld [vmem:[#allocation2 + $0x200] sm:$0xff]
          %v1367 = vld [vmem:[#allocation2 + $0x208] sm:$0xff]
          %v1368 = vld [vmem:[#allocation2 + $0x210] sm:$0xff]
          %v1369 = vld [vmem:[#allocation2 + $0x218] sm:$0xff]
          %v1370 = vld [vmem:[#allocation2 + $0x220] sm:$0xff]
          %v1371 = vld [vmem:[#allocation2 + $0x228] sm:$0xff]
          %v1372 = vld [vmem:[#allocation2 + $0x230] sm:$0xff]
          %v1373 = vld [vmem:[#allocation2 + $0x238] sm:$0xff]
          %v1374 = vld [vmem:[#allocation2 + $0x240] sm:$0xff]
          %v1375 = vld [vmem:[#allocation2 + $0x248] sm:$0xff]
          %v1376 = vld [vmem:[#allocation2 + $0x250] sm:$0xff]
          %v1377 = vld [vmem:[#allocation2 + $0x258] sm:$0xff]
          %v1378 = vld [vmem:[#allocation2 + $0x260] sm:$0xff]
          %v1379 = vld [vmem:[#allocation2 + $0x268] sm:$0xff]
          %v1380 = vld [vmem:[#allocation2 + $0x270] sm:$0xff]
          %v1381 = vld [vmem:[#allocation2 + $0x278] sm:$0xff]
          %v1382 = vld [vmem:[#allocation2 + $0x280] sm:$0xff]
          %v1383 = vld [vmem:[#allocation2 + $0x288] sm:$0xff]
          %v1384 = vld [vmem:[#allocation2 + $0x290] sm:$0xff]
          %v1385 = vld [vmem:[#allocation2 + $0x298] sm:$0xff]
          %v1386 = vld [vmem:[#allocation2 + $0x2a0] sm:$0xff]
          %v1387 = vld [vmem:[#allocation2 + $0x2a8] sm:$0xff]
          %v1388 = vld [vmem:[#allocation2 + $0x2b0] sm:$0xff]
          %v1389 = vld [vmem:[#allocation2 + $0x2b8] sm:$0xff]
          %v1390 = vld [vmem:[#allocation2 + $0x2c0] sm:$0xff]
          %v1391 = vld [vmem:[#allocation2 + $0x2c8] sm:$0xff]
          %v1392 = vld [vmem:[#allocation2 + $0x2d0] sm:$0xff]
          %v1393 = vld [vmem:[#allocation2 + $0x2d8] sm:$0xff]
          %v1394 = vld [vmem:[#allocation2 + $0x2e0] sm:$0xff]
          %v1395 = vld [vmem:[#allocation2 + $0x2e8] sm:$0xff]
          %v1396 = vld [vmem:[#allocation2 + $0x2f0] sm:$0xff]
          %v1397 = vld [vmem:[#allocation2 + $0x2f8] sm:$0xff]
          %v1398 = vld [vmem:[#allocation2 + $0x300] sm:$0xff]
          %v1399 = vld [vmem:[#allocation2 + $0x308] sm:$0xff]
          %v1400 = vld [vmem:[#allocation2 + $0x310] sm:$0xff]
          %v1401 = vld [vmem:[#allocation2 + $0x318] sm:$0xff]
          %v1402 = vld [vmem:[#allocation2 + $0x320] sm:$0xff]
          %v1403 = vld [vmem:[#allocation2 + $0x328] sm:$0xff]
          %v1404 = vld [vmem:[#allocation2 + $0x330] sm:$0xff]
          %v1405 = vld [vmem:[#allocation2 + $0x338] sm:$0xff]
          %v1406 = vld [vmem:[#allocation2 + $0x340] sm:$0xff]
          %v1407 = vld [vmem:[#allocation2 + $0x348] sm:$0xff]
          %v1408 = vld [vmem:[#allocation2 + $0x350] sm:$0xff]
          %v1409 = vld [vmem:[#allocation2 + $0x358] sm:$0xff]
          %v1410 = vld [vmem:[#allocation2 + $0x360] sm:$0xff]
          %v1411 = vld [vmem:[#allocation2 + $0x368] sm:$0xff]
          %v1412 = vld [vmem:[#allocation2 + $0x370] sm:$0xff]
          %v1413 = vld [vmem:[#allocation2 + $0x378] sm:$0xff]
          %v1414 = vld [vmem:[#allocation2 + $0x380] sm:$0xff]
          %v1415 = vld [vmem:[#allocation2 + $0x388] sm:$0xff]
          %v1416 = vld [vmem:[#allocation2 + $0x390] sm:$0xff]
          %v1417 = vld [vmem:[#allocation2 + $0x398] sm:$0xff]
          %v1418 = vld [vmem:[#allocation2 + $0x3a0] sm:$0xff]
          %v1419 = vld [vmem:[#allocation2 + $0x3a8] sm:$0xff]
          %v1420 = vld [vmem:[#allocation2 + $0x3b0] sm:$0xff]
          %v1421 = vld [vmem:[#allocation2 + $0x3b8] sm:$0xff]
          %v1422 = vld [vmem:[#allocation2 + $0x3c0] sm:$0xff]
          %v1423 = vld [vmem:[#allocation2 + $0x3c8] sm:$0xff]
          %v1424 = vld [vmem:[#allocation2 + $0x3d0] sm:$0xff]
          %v1425 = vld [vmem:[#allocation2 + $0x3d8] sm:$0xff]
          %v1426 = vld [vmem:[#allocation2 + $0x3e0] sm:$0xff]
          %v1427 = vld [vmem:[#allocation2 + $0x3e8] sm:$0xff]
          %v1428 = vld [vmem:[#allocation2 + $0x3f0] sm:$0xff]
          %v1429 = vld [vmem:[#allocation2 + $0x3f8] sm:$0xff]
          %1430 = vst [vmem:[%s231] sm:$0xff] %v1302
          %1431 = vst [vmem:[%s231 + $0x8] sm:$0xff] %v1303
          %1432 = vst [vmem:[%s231 + $0x10] sm:$0xff] %v1304
          %1433 = vst [vmem:[%s231 + $0x18] sm:$0xff] %v1305
          %1434 = vst [vmem:[%s231 + $0x20] sm:$0xff] %v1306
          %1435 = vst [vmem:[%s231 + $0x28] sm:$0xff] %v1307
          %1436 = vst [vmem:[%s231 + $0x30] sm:$0xff] %v1308
          %1437 = vst [vmem:[%s231 + $0x38] sm:$0xff] %v1309
          %1438 = vst [vmem:[%s231 + $0x40] sm:$0xff] %v1310
          %1439 = vst [vmem:[%s231 + $0x48] sm:$0xff] %v1311
          %1440 = vst [vmem:[%s231 + $0x50] sm:$0xff] %v1312
          %1441 = vst [vmem:[%s231 + $0x58] sm:$0xff] %v1313
          %1442 = vst [vmem:[%s231 + $0x60] sm:$0xff] %v1314
          %1443 = vst [vmem:[%s231 + $0x68] sm:$0xff] %v1315
          %1444 = vst [vmem:[%s231 + $0x70] sm:$0xff] %v1316
          %1445 = vst [vmem:[%s231 + $0x78] sm:$0xff] %v1317
          %1446 = vst [vmem:[%s231 + $0x80] sm:$0xff] %v1318
          %1447 = vst [vmem:[%s231 + $0x88] sm:$0xff] %v1319
          %1448 = vst [vmem:[%s231 + $0x90] sm:$0xff] %v1320
          %1449 = vst [vmem:[%s231 + $0x98] sm:$0xff] %v1321
          %1450 = vst [vmem:[%s231 + $0xa0] sm:$0xff] %v1322
          %1451 = vst [vmem:[%s231 + $0xa8] sm:$0xff] %v1323
          %1452 = vst [vmem:[%s231 + $0xb0] sm:$0xff] %v1324
          %1453 = vst [vmem:[%s231 + $0xb8] sm:$0xff] %v1325
          %1454 = vst [vmem:[%s231 + $0xc0] sm:$0xff] %v1326
          %1455 = vst [vmem:[%s231 + $0xc8] sm:$0xff] %v1327
          %1456 = vst [vmem:[%s231 + $0xd0] sm:$0xff] %v1328
          %1457 = vst [vmem:[%s231 + $0xd8] sm:$0xff] %v1329
          %1458 = vst [vmem:[%s231 + $0xe0] sm:$0xff] %v1330
          %1459 = vst [vmem:[%s231 + $0xe8] sm:$0xff] %v1331
          %1460 = vst [vmem:[%s231 + $0xf0] sm:$0xff] %v1332
          %1461 = vst [vmem:[%s231 + $0xf8] sm:$0xff] %v1333
          %1462 = vst [vmem:[%s231 + $0x100] sm:$0xff] %v1334
          %1463 = vst [vmem:[%s231 + $0x108] sm:$0xff] %v1335
          %1464 = vst [vmem:[%s231 + $0x110] sm:$0xff] %v1336
          %1465 = vst [vmem:[%s231 + $0x118] sm:$0xff] %v1337
          %1466 = vst [vmem:[%s231 + $0x120] sm:$0xff] %v1338
          %1467 = vst [vmem:[%s231 + $0x128] sm:$0xff] %v1339
          %1468 = vst [vmem:[%s231 + $0x130] sm:$0xff] %v1340
          %1469 = vst [vmem:[%s231 + $0x138] sm:$0xff] %v1341
          %1470 = vst [vmem:[%s231 + $0x140] sm:$0xff] %v1342
          %1471 = vst [vmem:[%s231 + $0x148] sm:$0xff] %v1343
          %1472 = vst [vmem:[%s231 + $0x150] sm:$0xff] %v1344
          %1473 = vst [vmem:[%s231 + $0x158] sm:$0xff] %v1345
          %1474 = vst [vmem:[%s231 + $0x160] sm:$0xff] %v1346
          %1475 = vst [vmem:[%s231 + $0x168] sm:$0xff] %v1347
          %1476 = vst [vmem:[%s231 + $0x170] sm:$0xff] %v1348
          %1477 = vst [vmem:[%s231 + $0x178] sm:$0xff] %v1349
          %1478 = vst [vmem:[%s231 + $0x180] sm:$0xff] %v1350
          %1479 = vst [vmem:[%s231 + $0x188] sm:$0xff] %v1351
          %1480 = vst [vmem:[%s231 + $0x190] sm:$0xff] %v1352
          %1481 = vst [vmem:[%s231 + $0x198] sm:$0xff] %v1353
          %1482 = vst [vmem:[%s231 + $0x1a0] sm:$0xff] %v1354
          %1483 = vst [vmem:[%s231 + $0x1a8] sm:$0xff] %v1355
          %1484 = vst [vmem:[%s231 + $0x1b0] sm:$0xff] %v1356
          %1485 = vst [vmem:[%s231 + $0x1b8] sm:$0xff] %v1357
          %1486 = vst [vmem:[%s231 + $0x1c0] sm:$0xff] %v1358
          %1487 = vst [vmem:[%s231 + $0x1c8] sm:$0xff] %v1359
          %1488 = vst [vmem:[%s231 + $0x1d0] sm:$0xff] %v1360
          %1489 = vst [vmem:[%s231 + $0x1d8] sm:$0xff] %v1361
          %1490 = vst [vmem:[%s231 + $0x1e0] sm:$0xff] %v1362
          %1491 = vst [vmem:[%s231 + $0x1e8] sm:$0xff] %v1363
          %1492 = vst [vmem:[%s231 + $0x1f0] sm:$0xff] %v1364
          %1493 = vst [vmem:[%s231 + $0x1f8] sm:$0xff] %v1365
          %1494 = vst [vmem:[%s231 + $0x200] sm:$0xff] %v1366
          %1495 = vst [vmem:[%s231 + $0x208] sm:$0xff] %v1367
          %1496 = vst [vmem:[%s231 + $0x210] sm:$0xff] %v1368
          %1497 = vst [vmem:[%s231 + $0x218] sm:$0xff] %v1369
          %1498 = vst [vmem:[%s231 + $0x220] sm:$0xff] %v1370
          %1499 = vst [vmem:[%s231 + $0x228] sm:$0xff] %v1371
          %1500 = vst [vmem:[%s231 + $0x230] sm:$0xff] %v1372
          %1501 = vst [vmem:[%s231 + $0x238] sm:$0xff] %v1373
          %1502 = vst [vmem:[%s231 + $0x240] sm:$0xff] %v1374
          %1503 = vst [vmem:[%s231 + $0x248] sm:$0xff] %v1375
          %1504 = vst [vmem:[%s231 + $0x250] sm:$0xff] %v1376
          %1505 = vst [vmem:[%s231 + $0x258] sm:$0xff] %v1377
          %1506 = vst [vmem:[%s231 + $0x260] sm:$0xff] %v1378
          %1507 = vst [vmem:[%s231 + $0x268] sm:$0xff] %v1379
          %1508 = vst [vmem:[%s231 + $0x270] sm:$0xff] %v1380
          %1509 = vst [vmem:[%s231 + $0x278] sm:$0xff] %v1381
          %1510 = vst [vmem:[%s231 + $0x280] sm:$0xff] %v1382
          %1511 = vst [vmem:[%s231 + $0x288] sm:$0xff] %v1383
          %1512 = vst [vmem:[%s231 + $0x290] sm:$0xff] %v1384
          %1513 = vst [vmem:[%s231 + $0x298] sm:$0xff] %v1385
          %1514 = vst [vmem:[%s231 + $0x2a0] sm:$0xff] %v1386
          %1515 = vst [vmem:[%s231 + $0x2a8] sm:$0xff] %v1387
          %1516 = vst [vmem:[%s231 + $0x2b0] sm:$0xff] %v1388
          %1517 = vst [vmem:[%s231 + $0x2b8] sm:$0xff] %v1389
          %1518 = vst [vmem:[%s231 + $0x2c0] sm:$0xff] %v1390
          %1519 = vst [vmem:[%s231 + $0x2c8] sm:$0xff] %v1391
          %1520 = vst [vmem:[%s231 + $0x2d0] sm:$0xff] %v1392
          %1521 = vst [vmem:[%s231 + $0x2d8] sm:$0xff] %v1393
          %1522 = vst [vmem:[%s231 + $0x2e0] sm:$0xff] %v1394
          %1523 = vst [vmem:[%s231 + $0x2e8] sm:$0xff] %v1395
          %1524 = vst [vmem:[%s231 + $0x2f0] sm:$0xff] %v1396
          %1525 = vst [vmem:[%s231 + $0x2f8] sm:$0xff] %v1397
          %1526 = vst [vmem:[%s231 + $0x300] sm:$0xff] %v1398
          %1527 = vst [vmem:[%s231 + $0x308] sm:$0xff] %v1399
          %1528 = vst [vmem:[%s231 + $0x310] sm:$0xff] %v1400
          %1529 = vst [vmem:[%s231 + $0x318] sm:$0xff] %v1401
          %1530 = vst [vmem:[%s231 + $0x320] sm:$0xff] %v1402
          %1531 = vst [vmem:[%s231 + $0x328] sm:$0xff] %v1403
          %1532 = vst [vmem:[%s231 + $0x330] sm:$0xff] %v1404
          %1533 = vst [vmem:[%s231 + $0x338] sm:$0xff] %v1405
          %1534 = vst [vmem:[%s231 + $0x340] sm:$0xff] %v1406
          %1535 = vst [vmem:[%s231 + $0x348] sm:$0xff] %v1407
          %1536 = vst [vmem:[%s231 + $0x350] sm:$0xff] %v1408
          %1537 = vst [vmem:[%s231 + $0x358] sm:$0xff] %v1409
          %1538 = vst [vmem:[%s231 + $0x360] sm:$0xff] %v1410
          %1539 = vst [vmem:[%s231 + $0x368] sm:$0xff] %v1411
          %1540 = vst [vmem:[%s231 + $0x370] sm:$0xff] %v1412
          %1541 = vst [vmem:[%s231 + $0x378] sm:$0xff] %v1413
          %1542 = vst [vmem:[%s231 + $0x380] sm:$0xff] %v1414
          %1543 = vst [vmem:[%s231 + $0x388] sm:$0xff] %v1415
          %1544 = vst [vmem:[%s231 + $0x390] sm:$0xff] %v1416
          %1545 = vst [vmem:[%s231 + $0x398] sm:$0xff] %v1417
          %1546 = vst [vmem:[%s231 + $0x3a0] sm:$0xff] %v1418
          %1547 = vst [vmem:[%s231 + $0x3a8] sm:$0xff] %v1419
          %1548 = vst [vmem:[%s231 + $0x3b0] sm:$0xff] %v1420
          %1549 = vst [vmem:[%s231 + $0x3b8] sm:$0xff] %v1421
          %1550 = vst [vmem:[%s231 + $0x3c0] sm:$0xff] %v1422
          %1551 = vst [vmem:[%s231 + $0x3c8] sm:$0xff] %v1423
          %1552 = vst [vmem:[%s231 + $0x3d0] sm:$0xff] %v1424
          %1553 = vst [vmem:[%s231 + $0x3d8] sm:$0xff] %v1425
          %1554 = vst [vmem:[%s231 + $0x3e0] sm:$0xff] %v1426
          %1555 = vst [vmem:[%s231 + $0x3e8] sm:$0xff] %v1427
          %1556 = vst [vmem:[%s231 + $0x3f0] sm:$0xff] %v1428
          %1557 = vst [vmem:[%s231 + $0x3f8] sm:$0xff] %v1429
        $region44: #{tpu_custom_call.1} parent=27 // pred_fallthru
          _
        %s1558 = sand.u32 %s107, 1
        %s1559 = scalar_lea.sflag [#allocation5], %s1558
        %s1560 = sand.u32 %s107, 1
        %s1561 = smul.addr %s1560, 1024
        %s1562 = scalar_lea.vmem [#allocation8], %s1561
        // Predicated region
        $region45: #{tpu_custom_call.1} parent=27 // pred_check
          %p1563 = pneg %p117
        $region46: #{tpu_custom_call.1} parent=27 // pred_check_branch
          %1565 = sbr.rel (%p1563) target = $region48
        $region47: #{tpu_custom_call.1} parent=27 // pred_region
          %s1566 = smul.u32 64, %s27
          %s1567 = smul.u32 2, %s28
          %s1569 = ssub.s32 16384, 16384
          %1570 = vsyncadd %s1559, %s1569
          %s1571 = smul.addr %s1566, 6
          %s1572 = sadd.s32 %s1567, %s1571
          %s1573 = smul.addr %s1572, 128
          %s1574 = scalar_lea.hbm %s2, %s1573
          %s1575 = sshll.u32 %s1562, 4
          %s1576 = int_to_ptr.vmem [resolvable:$true] %s1575
          %1581 = dma.vmem_to_hbm [thread:$0]  %s1576, 16384, %s1574, %s1559, 256, 768, 16
        $region48: #{tpu_custom_call.1} parent=27 // pred_fallthru
          _
      $region28: #{tpu_custom_call.1} parent=5 // pred_fallthru
        _
      %p1582 = scmp.le.s32.totalorder 2, %s17
      // Predicated region
      $region49: #{tpu_custom_call.1} parent=5 // pred_check
        %p1583 = pneg %p1582
      $region50: #{tpu_custom_call.1} parent=5 // pred_check_branch
        %1585 = sbr.rel (%p1583) target = $region52
      $region51: #{tpu_custom_call.1} parent=5 // pred_region
        %s1586 = ssub.s32 %s17, 2
        // Predicated region
        $region53: #{tpu_custom_call.1} parent=51 // pred_check
          %p1587 = pneg %p123
        $region54: #{tpu_custom_call.1} parent=51 // pred_check_branch
          %1589 = sbr.rel (%p1587) target = $region56
        $region55: #{tpu_custom_call.1} parent=51 // pred_region
          %s1590 = sand.u32 %s108, 1
          %s1591 = scalar_lea.sflag [#allocation5], %s1590
          %s1592 = sand.u32 %s108, 1
          %s1593 = smul.addr %s1592, 1024
          %s1594 = scalar_lea.vmem [#allocation8], %s1593
          %1595 = dma.done %s1591, 16384
        $region56: #{tpu_custom_call.1} parent=51 // pred_fallthru
          _
      $region52: #{tpu_custom_call.1} parent=5 // pred_fallthru
        _
    $region6: #{tpu_custom_call.1} parent=1 // loop_footer
      %s21 = sadd.s32 1, %s17
    $region7: #{tpu_custom_call.1} parent=1 // loop_footer_branch
      %16 = sbr.rel target = $region3
    $region8: #{tpu_custom_call.1} parent=1 // loop_exit
      _
    %1596 = vsyncpa [#allocation4], 1
    %s1597 = scalar_lea.sflag [#allocation4], 1
    %1598 = vsyncpa %s1597, 1
    %1599 = vsyncpa [#allocation7], 1
    %s1600 = scalar_lea.sflag [#allocation7], 1
    %1601 = vsyncpa %s1600, 1
    %1602 = vsyncpa [#allocation5], 1
    %s1603 = scalar_lea.sflag [#allocation5], 1
    %1604 = vsyncpa %s1603, 1

</llo_original>
